<compile_context>
chip_gen: v6e
topology: v6e:2x2x1
jax: 0.10.0
libtpu: 0.0.40
codegen_flags: <defaults>
</compile_context>

<pallas_src>
import math
from functools import partial
from typing import NamedTuple

import jax
import jax.numpy as jnp
from jax.experimental import pallas as pl
from jax.experimental.pallas import tpu as pltpu


def _round_up(x, m):
    return -(-x // m) * m


def _gru_combine(gx, gh, h, hidden):
    """PyTorch GRU cell given gx = x @ W_ih^T + b_ih and gh = h @ W_hh^T + b_hh."""
    r = jax.nn.sigmoid(gx[:, :hidden] + gh[:, :hidden])
    z = jax.nn.sigmoid(gx[:, hidden:2 * hidden] + gh[:, hidden:2 * hidden])
    n = jnp.tanh(gx[:, 2 * hidden:3 * hidden] + r * gh[:, 2 * hidden:3 * hidden])
    return (1.0 - z) * n + z * h


def _ead_kernel(seqs_ref, ma_ref, rec_ref, slab_ref, pred_ref, *,
                T, H, Fp, WK, enc_off, score_off, vec_row):
    B = ma_ref.shape[0]
    G = 3 * H

    mask = ma_ref[:, :T]                          # [B, T]
    y0 = ma_ref[:, 2 * T - 1:2 * T]               # allys[:, T-1], [B, 1]

    # ---- unpack packed parameter slabs (loaded / broadcast ONCE) ----
    enc_wih = slab_ref[0:Fp, :G]                  # [Fp, 3H] f32
    dec_wih_c = slab_ref[Fp:Fp + H, :G]           # [H, 3H]  f32 (context part)
    enc_bih = slab_ref[vec_row + 0:vec_row + 1, :G]                       # [1, 3H]
    enc_bhh = jnp.broadcast_to(slab_ref[vec_row + 1:vec_row + 2, :G], (B, G))
    dec_bhh = jnp.broadcast_to(slab_ref[vec_row + 2:vec_row + 3, :G], (B, G))
    b_attn = jnp.broadcast_to(slab_ref[vec_row + 3:vec_row + 4, :T], (B, T))
    dec_bih = jnp.broadcast_to(slab_ref[vec_row + 4:vec_row + 5, :G], (B, G))
    dec_wih_y = jnp.broadcast_to(slab_ref[vec_row + 5:vec_row + 6, :G], (B, G))
    wout = jnp.broadcast_to(slab_ref[vec_row + 6:vec_row + 7, :H], (B, H))
    bout = jnp.broadcast_to(slab_ref[vec_row + 7:vec_row + 8, 0:1], (B, 1))

    enc_whh = rec_ref[:, :G]                                   # bf16 [H, 3H]
    dec_whh_attn = rec_ref[:, enc_off:enc_off + score_off + T]  # bf16 [H, score_off+T]

    # ---------------- Encoder ----------------
    # Input gates for every time step in ONE matmul (hoisted off the recurrence).
    gx_all = (jnp.dot(seqs_ref[...], enc_wih,
                      preferred_element_type=jnp.float32) + enc_bih)   # [T*B, 3H]

    h = jnp.zeros((B, H), jnp.float32)
    e_list = []                              # masked hidden states (all_hidden=True)
    for t in range(T):                       # T is small -> static unroll is fine
        gx = gx_all[t * B:(t + 1) * B, :]
        gh = (jnp.dot(h.astype(jnp.bfloat16), enc_whh,
                      preferred_element_type=jnp.float32) + enc_bhh)
        h = _gru_combine(gx, gh, h, H)
        e_list.append(h * mask[:, t:t + 1])  # mask only the returned hiddens

    # Hoisted context projection: sum_t w_t*(e_t @ W) == (sum_t w_t*e_t) @ W,
    # so project all masked hiddens through the decoder context weights once.
    E = jnp.concatenate(e_list, axis=0)                              # [T*B, H]
    proj_E = jnp.dot(E, dec_wih_c, preferred_element_type=jnp.float32)  # [T*B, 3H]

    # ---------------- Decoder with per-step attention ----------------
    y_prev = y0
    h_dec = jnp.zeros((B, H), jnp.float32)
    preds = []
    for _ in range(WK):
        # Single fused MXU matmul per step -> GRU hidden gates AND attention scores.
        fused = jnp.dot(h_dec.astype(jnp.bfloat16), dec_whh_attn,
                        preferred_element_type=jnp.float32)          # [B, score_off+T]
        gh = fused[:, :G] + dec_bhh
        scores = fused[:, score_off:score_off + T] + b_attn          # [B, T]

        # TODO(synk): padded encoder steps are not masked out of the softmax
        # (their hiddens are zeroed, so they only rescale the context); verify
        # against the PyTorch DecoderAttention.
        scores = scores - jnp.max(scores, axis=-1, keepdims=True)
        w = jnp.exp(scores)
        w = w * pl.reciprocal(jnp.sum(w, axis=-1, keepdims=True), approx=True)

        # Attention-weighted sum of PRE-PROJECTED hiddens (pure VPU, no matmul).
        gx = dec_bih + y_prev * dec_wih_y
        for t in range(T):
            gx = gx + w[:, t:t + 1] * proj_E[t * B:(t + 1) * B, :]

        h_dec = _gru_combine(gx, gh, h_dec, H)

        # Output head Linear(H, 1) on VPU + lane reduce.
        y = jnp.sum(h_dec * wout, axis=-1, keepdims=True) + bout     # [B, 1]
        preds.append(y)
        y_prev = y                           # ys=None -> feed prediction back

    pred_ref[...] = jnp.concatenate(preds, axis=1)   # single store at the end


class EADConfig(NamedTuple):
    T: int
    H: int
    F: int
    Fp: int
    enc_off: int
    score_off: int
    vec_row: int


def init_params(key, size_seq, n_signals, rnn_dim):
    """Deterministic init mirroring PyTorch parameter shapes (uniform +-1/sqrt(H))."""
    H = rnn_dim
    ks = jax.random.split(key, 12)
    bnd = 1.0 / math.sqrt(H)

    def u(k, shape):
        return jax.random.uniform(k, shape, jnp.float32, -bnd, bnd)

    return {
        # encoder GRU (PyTorch layout: [3H, in], gate order r,z,n)
        'enc_wih': u(ks[0], (3 * H, n_signals)),
        'enc_whh': u(ks[1], (3 * H, H)),
        'enc_bih': u(ks[2], (3 * H,)),
        'enc_bhh': u(ks[3], (3 * H,)),
        # decoder attention score layer Linear(rnn_dim, size_seq)
        'w_attn': u(ks[4], (size_seq, H)),
        'b_attn': u(ks[5], (size_seq,)),
        # decoder GRU (input dim = rnn_dim + 1: [context | y_prev])
        'dec_wih': u(ks[6], (3 * H, H + 1)),
        'dec_whh': u(ks[7], (3 * H, H)),
        'dec_bih': u(ks[8], (3 * H,)),
        'dec_bhh': u(ks[9], (3 * H,)),
        # output head Linear(rnn_dim, 1)
        'wout': u(ks[10], (1, H)),
        'bout': u(ks[11], (1,)),
    }


def _pad_scores_default():
    """Pad the fused decoder weight so scores start at lane 128 on v6e/v7x only."""
    try:
        kind = jax.devices()[0].device_kind.lower()
    except Exception:
        return True
    return 'v5' not in kind


def pack_params(params, *, pad_scores=None):
    """One-time parameter packing (cache the result alongside the params)."""
    H = params['enc_whh'].shape[1]
    F = params['enc_wih'].shape[1]
    T = params['w_attn'].shape[0]
    G = 3 * H
    if pad_scores is None:
        pad_scores = _pad_scores_default()

    enc_off = _round_up(G, 128)                 # encoder weights padded to lane group
    score_off = enc_off if (pad_scores and G <= enc_off) else G
    Fp = _round_up(max(F, 8), 8)
    Hp = _round_up(H, 8)
    vec_row = Fp + Hp
    lanes = _round_up(max(G, H, T, 1), 128)

    # bf16 recurrent-weight slab: [ enc_whh.T | pad ][ dec_whh.T | pad | w_attn.T ]
    rec = jnp.zeros((H, enc_off + score_off + T), jnp.float32)
    rec = rec.at[:, :G].set(params['enc_whh'].T)
    rec = rec.at[:, enc_off:enc_off + G].set(params['dec_whh'].T)
    rec = rec.at[:, enc_off + score_off:enc_off + score_off + T].set(params['w_attn'].T)
    rec = rec.astype(jnp.bfloat16)

    # f32 slab: [ enc_wih.T rows | dec_wih(context).T rows | bias / vector rows ]
    slab = jnp.zeros((vec_row + 8, lanes), jnp.float32)
    slab = slab.at[:F, :G].set(params['enc_wih'].T)
    slab = slab.at[Fp:Fp + H, :G].set(params['dec_wih'][:, :H].T)
    slab = slab.at[vec_row + 0, :G].set(params['enc_bih'])
    slab = slab.at[vec_row + 1, :G].set(params['enc_bhh'])
    slab = slab.at[vec_row + 2, :G].set(params['dec_bhh'])
    slab = slab.at[vec_row + 3, :T].set(params['b_attn'])
    slab = slab.at[vec_row + 4, :G].set(params['dec_bih'])
    slab = slab.at[vec_row + 5, :G].set(params['dec_wih'][:, H])
    slab = slab.at[vec_row + 6, :H].set(params['wout'].reshape(H))
    slab = slab.at[vec_row + 7, 0].set(params['bout'][0])

    cfg = EADConfig(T=T, H=H, F=F, Fp=Fp, enc_off=enc_off,
                    score_off=score_off, vec_row=vec_row)
    return rec, slab, cfg


@partial(jax.jit, static_argnames=('config', 'wk_ahead'))
def encoder_attention_decoder(seqs, mask_seq, allys, rec, slab, config, wk_ahead):
    B, T, F = seqs.shape
    H, Fp = config.H, config.Fp

    # Pad batch to a full sublane group (8) and features to the packed width.
    Bp = _round_up(max(B, 8), 8)
    seqs = jnp.pad(seqs, ((0, Bp - B), (0, 0), (0, Fp - F)))
    mask_allys = jnp.pad(jnp.concatenate([mask_seq, allys], axis=1),
                         ((0, Bp - B), (0, 0)))                     # [Bp, 2T]
    # [B, T, F] -> [T*B, Fp]: hoisted input-gate matmul sliced per step with
    # static aligned sublane offsets inside the kernel.
    seqs_tb = jnp.transpose(seqs, (1, 0, 2)).reshape(T * Bp, Fp)

    kernel = partial(_ead_kernel, T=T, H=H, Fp=Fp, WK=wk_ahead,
                     enc_off=config.enc_off, score_off=config.score_off,
                     vec_row=config.vec_row)

    vmem = pl.BlockSpec(memory_space=pltpu.MemorySpace.VMEM)
    preds = pl.pallas_call(
        kernel,
        out_shape=jax.ShapeDtypeStruct((Bp, wk_ahead), jnp.float32),
        in_specs=[vmem, vmem, vmem, vmem],
        out_specs=vmem,
        compiler_params=pltpu.CompilerParams(vmem_limit_bytes=32 * 1024 * 1024),
        # TODO(synk): add a batch grid axis with dimension_semantics=("parallel",)
        # once real batch sizes should use both v7x TensorCores; at B<=8 one call
        # on one core is the right structure.
    )(seqs_tb, mask_allys, rec, slab)
    return preds[:B]


if __name__ == "__main__":
    # Small shapes consistent with the module: size_seq=8, n_signals=4,
    # rnn_dim=32, wk_ahead=4, batch=2.
    B, T, F, H, WK = 2, 8, 4, 32, 4

    key = jax.random.PRNGKey(0)
    k_seq, k_ally, k_param = jax.random.split(key, 3)

    seqs = jax.random.normal(k_seq, (B, T, F), jnp.float32)
    mask_seq = jnp.ones((B, T), jnp.float32).at[1, 6:].set(0.0)   # pad tail of sample 1
    allys = jax.random.normal(k_ally, (B, T), jnp.float32)
    params = init_params(k_param, size_seq=T, n_signals=F, rnn_dim=H)

    # One-time parameter packing (off the hot path).
    rec, slab, cfg = pack_params(params)

    preds = encoder_attention_decoder(seqs, mask_seq, allys, rec, slab, cfg, WK)
    jax.block_until_ready(preds)

    assert preds.shape == (B, WK)
    assert bool(jnp.all(jnp.isfinite(preds)))
    print("KERNEL_OK")
</pallas_src>

<mosaic_0001>
module attributes {stable_mosaic.version = 11 : i64} {
  func.func @_ead_kernel(%arg0: memref<64x8xf32, #tpu.memory_space<vmem>>, %arg1: memref<8x16xf32, #tpu.memory_space<vmem>>, %arg2: memref<32x264xbf16, #tpu.memory_space<vmem>>, %arg3: memref<48x128xf32, #tpu.memory_space<vmem>>, %arg4: memref<8x4xf32, #tpu.memory_space<vmem>>) attributes {dimension_semantics = [], scalar_prefetch = 0 : i64, scratch_operands = 0 : i64, tpu.core_type = #tpu.core_type<tc>} {
    %c0 = arith.constant 0 : index
    %c0_0 = arith.constant 0 : index
    %0 = vector.load %arg1[%c0, %c0_0] : memref<8x16xf32, #tpu.memory_space<vmem>>, vector<8x8xf32>
    %c0_1 = arith.constant 0 : index
    %c15 = arith.constant 15 : index
    %1 = vector.load %arg1[%c0_1, %c15] : memref<8x16xf32, #tpu.memory_space<vmem>>, vector<8x1xf32>
    %c0_2 = arith.constant 0 : index
    %c0_3 = arith.constant 0 : index
    %2 = vector.load %arg3[%c0_2, %c0_3] : memref<48x128xf32, #tpu.memory_space<vmem>>, vector<8x96xf32>
    %c8 = arith.constant 8 : index
    %c0_4 = arith.constant 0 : index
    %3 = vector.load %arg3[%c8, %c0_4] : memref<48x128xf32, #tpu.memory_space<vmem>>, vector<32x96xf32>
    %c40 = arith.constant 40 : index
    %c0_5 = arith.constant 0 : index
    %4 = vector.load %arg3[%c40, %c0_5] : memref<48x128xf32, #tpu.memory_space<vmem>>, vector<1x96xf32>
    %c41 = arith.constant 41 : index
    %c0_6 = arith.constant 0 : index
    %5 = vector.load %arg3[%c41, %c0_6] : memref<48x128xf32, #tpu.memory_space<vmem>>, vector<1x96xf32>
    %6 = vector.shape_cast %5 : vector<1x96xf32> to vector<1x96xf32>
    %7 = vector.broadcast %6 : vector<1x96xf32> to vector<8x96xf32>
    %c42 = arith.constant 42 : index
    %c0_7 = arith.constant 0 : index
    %8 = vector.load %arg3[%c42, %c0_7] : memref<48x128xf32, #tpu.memory_space<vmem>>, vector<1x96xf32>
    %9 = vector.shape_cast %8 : vector<1x96xf32> to vector<1x96xf32>
    %10 = vector.broadcast %9 : vector<1x96xf32> to vector<8x96xf32>
    %c43 = arith.constant 43 : index
    %c0_8 = arith.constant 0 : index
    %11 = vector.load %arg3[%c43, %c0_8] : memref<48x128xf32, #tpu.memory_space<vmem>>, vector<1x8xf32>
    %12 = vector.shape_cast %11 : vector<1x8xf32> to vector<1x8xf32>
    %13 = vector.broadcast %12 : vector<1x8xf32> to vector<8x8xf32>
    %c44 = arith.constant 44 : index
    %c0_9 = arith.constant 0 : index
    %14 = vector.load %arg3[%c44, %c0_9] : memref<48x128xf32, #tpu.memory_space<vmem>>, vector<1x96xf32>
    %15 = vector.shape_cast %14 : vector<1x96xf32> to vector<1x96xf32>
    %16 = vector.broadcast %15 : vector<1x96xf32> to vector<8x96xf32>
    %c45 = arith.constant 45 : index
    %c0_10 = arith.constant 0 : index
    %17 = vector.load %arg3[%c45, %c0_10] : memref<48x128xf32, #tpu.memory_space<vmem>>, vector<1x96xf32>
    %18 = vector.shape_cast %17 : vector<1x96xf32> to vector<1x96xf32>
    %19 = vector.broadcast %18 : vector<1x96xf32> to vector<8x96xf32>
    %c46 = arith.constant 46 : index
    %c0_11 = arith.constant 0 : index
    %20 = vector.load %arg3[%c46, %c0_11] : memref<48x128xf32, #tpu.memory_space<vmem>>, vector<1x32xf32>
    %21 = vector.shape_cast %20 : vector<1x32xf32> to vector<1x32xf32>
    %22 = vector.broadcast %21 : vector<1x32xf32> to vector<8x32xf32>
    %c47 = arith.constant 47 : index
    %c0_12 = arith.constant 0 : index
    %23 = vector.load %arg3[%c47, %c0_12] : memref<48x128xf32, #tpu.memory_space<vmem>>, vector<1x1xf32>
    %24 = vector.shape_cast %23 : vector<1x1xf32> to vector<1x1xf32>
    %25 = vector.broadcast %24 : vector<1x1xf32> to vector<8x1xf32>
    %c0_13 = arith.constant 0 : index
    %c0_14 = arith.constant 0 : index
    %26 = vector.load %arg2[%c0_13, %c0_14] : memref<32x264xbf16, #tpu.memory_space<vmem>>, vector<32x96xbf16>
    %c0_15 = arith.constant 0 : index
    %c128 = arith.constant 128 : index
    %27 = vector.load %arg2[%c0_15, %c128] : memref<32x264xbf16, #tpu.memory_space<vmem>>, vector<32x136xbf16>
    %c0_16 = arith.constant 0 : index
    %c0_17 = arith.constant 0 : index
    %28 = vector.load %arg0[%c0_16, %c0_17] : memref<64x8xf32, #tpu.memory_space<vmem>>, vector<64x8xf32>
    %cst = arith.constant dense<0.000000e+00> : vector<64x96xf32>
    %29 = tpu.matmul %28, %2, %cst {dimension_numbers = #tpu.dot_dimension_numbers<[1], [0], [0], [1], [0, 0, 1, 1], [], []>} : vector<64x8xf32>, vector<8x96xf32>, vector<64x96xf32> -> vector<64x96xf32>
    %30 = vector.broadcast %4 : vector<1x96xf32> to vector<64x96xf32>
    %31 = arith.addf %29, %30 : vector<64x96xf32>
    %cst_18 = arith.constant 0.000000e+00 : f32
    %32 = vector.broadcast %cst_18 : f32 to vector<8x32xf32>
    %33 = vector.extract_strided_slice %31 {offsets = [0, 0], sizes = [8, 96], strides = [1, 1]} : vector<64x96xf32> to vector<8x96xf32>
    %34 = arith.truncf %32 : vector<8x32xf32> to vector<8x32xbf16>
    %cst_19 = arith.constant dense<0.000000e+00> : vector<8x96xf32>
    %35 = tpu.matmul %34, %26, %cst_19 {dimension_numbers = #tpu.dot_dimension_numbers<[1], [0], [0], [1], [0, 0, 1, 1], [], []>} : vector<8x32xbf16>, vector<32x96xbf16>, vector<8x96xf32> -> vector<8x96xf32>
    %36 = arith.addf %35, %7 : vector<8x96xf32>
    %37 = vector.extract_strided_slice %33 {offsets = [0, 0], sizes = [8, 32], strides = [1, 1]} : vector<8x96xf32> to vector<8x32xf32>
    %38 = vector.extract_strided_slice %36 {offsets = [0, 0], sizes = [8, 32], strides = [1, 1]} : vector<8x96xf32> to vector<8x32xf32>
    %39 = arith.addf %37, %38 : vector<8x32xf32>
    %40 = arith.negf %39 : vector<8x32xf32>
    %41 = math.exp %40 : vector<8x32xf32>
    %cst_20 = arith.constant 1.000000e+00 : f32
    %42 = vector.broadcast %cst_20 : f32 to vector<8x32xf32>
    %43 = arith.addf %42, %41 : vector<8x32xf32>
    %44 = arith.divf %42, %43 : vector<8x32xf32>
    %45 = vector.extract_strided_slice %33 {offsets = [0, 32], sizes = [8, 32], strides = [1, 1]} : vector<8x96xf32> to vector<8x32xf32>
    %46 = vector.extract_strided_slice %36 {offsets = [0, 32], sizes = [8, 32], strides = [1, 1]} : vector<8x96xf32> to vector<8x32xf32>
    %47 = arith.addf %45, %46 : vector<8x32xf32>
    %48 = arith.negf %47 : vector<8x32xf32>
    %49 = math.exp %48 : vector<8x32xf32>
    %cst_21 = arith.constant 1.000000e+00 : f32
    %50 = vector.broadcast %cst_21 : f32 to vector<8x32xf32>
    %51 = arith.addf %50, %49 : vector<8x32xf32>
    %52 = arith.divf %50, %51 : vector<8x32xf32>
    %53 = vector.extract_strided_slice %33 {offsets = [0, 64], sizes = [8, 32], strides = [1, 1]} : vector<8x96xf32> to vector<8x32xf32>
    %54 = vector.extract_strided_slice %36 {offsets = [0, 64], sizes = [8, 32], strides = [1, 1]} : vector<8x96xf32> to vector<8x32xf32>
    %55 = arith.mulf %44, %54 : vector<8x32xf32>
    %56 = arith.addf %53, %55 : vector<8x32xf32>
    %57 = math.tanh %56 : vector<8x32xf32>
    %cst_22 = arith.constant 1.000000e+00 : f32
    %58 = vector.broadcast %cst_22 : f32 to vector<8x32xf32>
    %59 = arith.subf %58, %52 : vector<8x32xf32>
    %60 = arith.mulf %59, %57 : vector<8x32xf32>
    %61 = arith.mulf %52, %32 : vector<8x32xf32>
    %62 = arith.addf %60, %61 : vector<8x32xf32>
    %63 = vector.extract_strided_slice %0 {offsets = [0, 0], sizes = [8, 1], strides = [1, 1]} : vector<8x8xf32> to vector<8x1xf32>
    %64 = vector.broadcast %63 : vector<8x1xf32> to vector<8x32xf32>
    %65 = arith.mulf %62, %64 : vector<8x32xf32>
    %66 = vector.extract_strided_slice %31 {offsets = [8, 0], sizes = [8, 96], strides = [1, 1]} : vector<64x96xf32> to vector<8x96xf32>
    %67 = arith.truncf %62 : vector<8x32xf32> to vector<8x32xbf16>
    %cst_23 = arith.constant dense<0.000000e+00> : vector<8x96xf32>
    %68 = tpu.matmul %67, %26, %cst_23 {dimension_numbers = #tpu.dot_dimension_numbers<[1], [0], [0], [1], [0, 0, 1, 1], [], []>} : vector<8x32xbf16>, vector<32x96xbf16>, vector<8x96xf32> -> vector<8x96xf32>
    %69 = arith.addf %68, %7 : vector<8x96xf32>
    %70 = vector.extract_strided_slice %66 {offsets = [0, 0], sizes = [8, 32], strides = [1, 1]} : vector<8x96xf32> to vector<8x32xf32>
    %71 = vector.extract_strided_slice %69 {offsets = [0, 0], sizes = [8, 32], strides = [1, 1]} : vector<8x96xf32> to vector<8x32xf32>
    %72 = arith.addf %70, %71 : vector<8x32xf32>
    %73 = arith.negf %72 : vector<8x32xf32>
    %74 = math.exp %73 : vector<8x32xf32>
    %cst_24 = arith.constant 1.000000e+00 : f32
    %75 = vector.broadcast %cst_24 : f32 to vector<8x32xf32>
    %76 = arith.addf %75, %74 : vector<8x32xf32>
    %77 = arith.divf %75, %76 : vector<8x32xf32>
    %78 = vector.extract_strided_slice %66 {offsets = [0, 32], sizes = [8, 32], strides = [1, 1]} : vector<8x96xf32> to vector<8x32xf32>
    %79 = vector.extract_strided_slice %69 {offsets = [0, 32], sizes = [8, 32], strides = [1, 1]} : vector<8x96xf32> to vector<8x32xf32>
    %80 = arith.addf %78, %79 : vector<8x32xf32>
    %81 = arith.negf %80 : vector<8x32xf32>
    %82 = math.exp %81 : vector<8x32xf32>
    %cst_25 = arith.constant 1.000000e+00 : f32
    %83 = vector.broadcast %cst_25 : f32 to vector<8x32xf32>
    %84 = arith.addf %83, %82 : vector<8x32xf32>
    %85 = arith.divf %83, %84 : vector<8x32xf32>
    %86 = vector.extract_strided_slice %66 {offsets = [0, 64], sizes = [8, 32], strides = [1, 1]} : vector<8x96xf32> to vector<8x32xf32>
    %87 = vector.extract_strided_slice %69 {offsets = [0, 64], sizes = [8, 32], strides = [1, 1]} : vector<8x96xf32> to vector<8x32xf32>
    %88 = arith.mulf %77, %87 : vector<8x32xf32>
    %89 = arith.addf %86, %88 : vector<8x32xf32>
    %90 = math.tanh %89 : vector<8x32xf32>
    %cst_26 = arith.constant 1.000000e+00 : f32
    %91 = vector.broadcast %cst_26 : f32 to vector<8x32xf32>
    %92 = arith.subf %91, %85 : vector<8x32xf32>
    %93 = arith.mulf %92, %90 : vector<8x32xf32>
    %94 = arith.mulf %85, %62 : vector<8x32xf32>
    %95 = arith.addf %93, %94 : vector<8x32xf32>
    %96 = vector.extract_strided_slice %0 {offsets = [0, 1], sizes = [8, 1], strides = [1, 1]} : vector<8x8xf32> to vector<8x1xf32>
    %97 = vector.broadcast %96 : vector<8x1xf32> to vector<8x32xf32>
    %98 = arith.mulf %95, %97 : vector<8x32xf32>
    %99 = vector.extract_strided_slice %31 {offsets = [16, 0], sizes = [8, 96], strides = [1, 1]} : vector<64x96xf32> to vector<8x96xf32>
    %100 = arith.truncf %95 : vector<8x32xf32> to vector<8x32xbf16>
    %cst_27 = arith.constant dense<0.000000e+00> : vector<8x96xf32>
    %101 = tpu.matmul %100, %26, %cst_27 {dimension_numbers = #tpu.dot_dimension_numbers<[1], [0], [0], [1], [0, 0, 1, 1], [], []>} : vector<8x32xbf16>, vector<32x96xbf16>, vector<8x96xf32> -> vector<8x96xf32>
    %102 = arith.addf %101, %7 : vector<8x96xf32>
    %103 = vector.extract_strided_slice %99 {offsets = [0, 0], sizes = [8, 32], strides = [1, 1]} : vector<8x96xf32> to vector<8x32xf32>
    %104 = vector.extract_strided_slice %102 {offsets = [0, 0], sizes = [8, 32], strides = [1, 1]} : vector<8x96xf32> to vector<8x32xf32>
    %105 = arith.addf %103, %104 : vector<8x32xf32>
    %106 = arith.negf %105 : vector<8x32xf32>
    %107 = math.exp %106 : vector<8x32xf32>
    %cst_28 = arith.constant 1.000000e+00 : f32
    %108 = vector.broadcast %cst_28 : f32 to vector<8x32xf32>
    %109 = arith.addf %108, %107 : vector<8x32xf32>
    %110 = arith.divf %108, %109 : vector<8x32xf32>
    %111 = vector.extract_strided_slice %99 {offsets = [0, 32], sizes = [8, 32], strides = [1, 1]} : vector<8x96xf32> to vector<8x32xf32>
    %112 = vector.extract_strided_slice %102 {offsets = [0, 32], sizes = [8, 32], strides = [1, 1]} : vector<8x96xf32> to vector<8x32xf32>
    %113 = arith.addf %111, %112 : vector<8x32xf32>
    %114 = arith.negf %113 : vector<8x32xf32>
    %115 = math.exp %114 : vector<8x32xf32>
    %cst_29 = arith.constant 1.000000e+00 : f32
    %116 = vector.broadcast %cst_29 : f32 to vector<8x32xf32>
    %117 = arith.addf %116, %115 : vector<8x32xf32>
    %118 = arith.divf %116, %117 : vector<8x32xf32>
    %119 = vector.extract_strided_slice %99 {offsets = [0, 64], sizes = [8, 32], strides = [1, 1]} : vector<8x96xf32> to vector<8x32xf32>
    %120 = vector.extract_strided_slice %102 {offsets = [0, 64], sizes = [8, 32], strides = [1, 1]} : vector<8x96xf32> to vector<8x32xf32>
    %121 = arith.mulf %110, %120 : vector<8x32xf32>
    %122 = arith.addf %119, %121 : vector<8x32xf32>
    %123 = math.tanh %122 : vector<8x32xf32>
    %cst_30 = arith.constant 1.000000e+00 : f32
    %124 = vector.broadcast %cst_30 : f32 to vector<8x32xf32>
    %125 = arith.subf %124, %118 : vector<8x32xf32>
    %126 = arith.mulf %125, %123 : vector<8x32xf32>
    %127 = arith.mulf %118, %95 : vector<8x32xf32>
    %128 = arith.addf %126, %127 : vector<8x32xf32>
    %129 = vector.extract_strided_slice %0 {offsets = [0, 2], sizes = [8, 1], strides = [1, 1]} : vector<8x8xf32> to vector<8x1xf32>
    %130 = vector.broadcast %129 : vector<8x1xf32> to vector<8x32xf32>
    %131 = arith.mulf %128, %130 : vector<8x32xf32>
    %132 = vector.extract_strided_slice %31 {offsets = [24, 0], sizes = [8, 96], strides = [1, 1]} : vector<64x96xf32> to vector<8x96xf32>
    %133 = arith.truncf %128 : vector<8x32xf32> to vector<8x32xbf16>
    %cst_31 = arith.constant dense<0.000000e+00> : vector<8x96xf32>
    %134 = tpu.matmul %133, %26, %cst_31 {dimension_numbers = #tpu.dot_dimension_numbers<[1], [0], [0], [1], [0, 0, 1, 1], [], []>} : vector<8x32xbf16>, vector<32x96xbf16>, vector<8x96xf32> -> vector<8x96xf32>
    %135 = arith.addf %134, %7 : vector<8x96xf32>
    %136 = vector.extract_strided_slice %132 {offsets = [0, 0], sizes = [8, 32], strides = [1, 1]} : vector<8x96xf32> to vector<8x32xf32>
    %137 = vector.extract_strided_slice %135 {offsets = [0, 0], sizes = [8, 32], strides = [1, 1]} : vector<8x96xf32> to vector<8x32xf32>
    %138 = arith.addf %136, %137 : vector<8x32xf32>
    %139 = arith.negf %138 : vector<8x32xf32>
    %140 = math.exp %139 : vector<8x32xf32>
    %cst_32 = arith.constant 1.000000e+00 : f32
    %141 = vector.broadcast %cst_32 : f32 to vector<8x32xf32>
    %142 = arith.addf %141, %140 : vector<8x32xf32>
    %143 = arith.divf %141, %142 : vector<8x32xf32>
    %144 = vector.extract_strided_slice %132 {offsets = [0, 32], sizes = [8, 32], strides = [1, 1]} : vector<8x96xf32> to vector<8x32xf32>
    %145 = vector.extract_strided_slice %135 {offsets = [0, 32], sizes = [8, 32], strides = [1, 1]} : vector<8x96xf32> to vector<8x32xf32>
    %146 = arith.addf %144, %145 : vector<8x32xf32>
    %147 = arith.negf %146 : vector<8x32xf32>
    %148 = math.exp %147 : vector<8x32xf32>
    %cst_33 = arith.constant 1.000000e+00 : f32
    %149 = vector.broadcast %cst_33 : f32 to vector<8x32xf32>
    %150 = arith.addf %149, %148 : vector<8x32xf32>
    %151 = arith.divf %149, %150 : vector<8x32xf32>
    %152 = vector.extract_strided_slice %132 {offsets = [0, 64], sizes = [8, 32], strides = [1, 1]} : vector<8x96xf32> to vector<8x32xf32>
    %153 = vector.extract_strided_slice %135 {offsets = [0, 64], sizes = [8, 32], strides = [1, 1]} : vector<8x96xf32> to vector<8x32xf32>
    %154 = arith.mulf %143, %153 : vector<8x32xf32>
    %155 = arith.addf %152, %154 : vector<8x32xf32>
    %156 = math.tanh %155 : vector<8x32xf32>
    %cst_34 = arith.constant 1.000000e+00 : f32
    %157 = vector.broadcast %cst_34 : f32 to vector<8x32xf32>
    %158 = arith.subf %157, %151 : vector<8x32xf32>
    %159 = arith.mulf %158, %156 : vector<8x32xf32>
    %160 = arith.mulf %151, %128 : vector<8x32xf32>
    %161 = arith.addf %159, %160 : vector<8x32xf32>
    %162 = vector.extract_strided_slice %0 {offsets = [0, 3], sizes = [8, 1], strides = [1, 1]} : vector<8x8xf32> to vector<8x1xf32>
    %163 = vector.broadcast %162 : vector<8x1xf32> to vector<8x32xf32>
    %164 = arith.mulf %161, %163 : vector<8x32xf32>
    %165 = vector.extract_strided_slice %31 {offsets = [32, 0], sizes = [8, 96], strides = [1, 1]} : vector<64x96xf32> to vector<8x96xf32>
    %166 = arith.truncf %161 : vector<8x32xf32> to vector<8x32xbf16>
    %cst_35 = arith.constant dense<0.000000e+00> : vector<8x96xf32>
    %167 = tpu.matmul %166, %26, %cst_35 {dimension_numbers = #tpu.dot_dimension_numbers<[1], [0], [0], [1], [0, 0, 1, 1], [], []>} : vector<8x32xbf16>, vector<32x96xbf16>, vector<8x96xf32> -> vector<8x96xf32>
    %168 = arith.addf %167, %7 : vector<8x96xf32>
    %169 = vector.extract_strided_slice %165 {offsets = [0, 0], sizes = [8, 32], strides = [1, 1]} : vector<8x96xf32> to vector<8x32xf32>
    %170 = vector.extract_strided_slice %168 {offsets = [0, 0], sizes = [8, 32], strides = [1, 1]} : vector<8x96xf32> to vector<8x32xf32>
    %171 = arith.addf %169, %170 : vector<8x32xf32>
    %172 = arith.negf %171 : vector<8x32xf32>
    %173 = math.exp %172 : vector<8x32xf32>
    %cst_36 = arith.constant 1.000000e+00 : f32
    %174 = vector.broadcast %cst_36 : f32 to vector<8x32xf32>
    %175 = arith.addf %174, %173 : vector<8x32xf32>
    %176 = arith.divf %174, %175 : vector<8x32xf32>
    %177 = vector.extract_strided_slice %165 {offsets = [0, 32], sizes = [8, 32], strides = [1, 1]} : vector<8x96xf32> to vector<8x32xf32>
    %178 = vector.extract_strided_slice %168 {offsets = [0, 32], sizes = [8, 32], strides = [1, 1]} : vector<8x96xf32> to vector<8x32xf32>
    %179 = arith.addf %177, %178 : vector<8x32xf32>
    %180 = arith.negf %179 : vector<8x32xf32>
    %181 = math.exp %180 : vector<8x32xf32>
    %cst_37 = arith.constant 1.000000e+00 : f32
    %182 = vector.broadcast %cst_37 : f32 to vector<8x32xf32>
    %183 = arith.addf %182, %181 : vector<8x32xf32>
    %184 = arith.divf %182, %183 : vector<8x32xf32>
    %185 = vector.extract_strided_slice %165 {offsets = [0, 64], sizes = [8, 32], strides = [1, 1]} : vector<8x96xf32> to vector<8x32xf32>
    %186 = vector.extract_strided_slice %168 {offsets = [0, 64], sizes = [8, 32], strides = [1, 1]} : vector<8x96xf32> to vector<8x32xf32>
    %187 = arith.mulf %176, %186 : vector<8x32xf32>
    %188 = arith.addf %185, %187 : vector<8x32xf32>
    %189 = math.tanh %188 : vector<8x32xf32>
    %cst_38 = arith.constant 1.000000e+00 : f32
    %190 = vector.broadcast %cst_38 : f32 to vector<8x32xf32>
    %191 = arith.subf %190, %184 : vector<8x32xf32>
    %192 = arith.mulf %191, %189 : vector<8x32xf32>
    %193 = arith.mulf %184, %161 : vector<8x32xf32>
    %194 = arith.addf %192, %193 : vector<8x32xf32>
    %195 = vector.extract_strided_slice %0 {offsets = [0, 4], sizes = [8, 1], strides = [1, 1]} : vector<8x8xf32> to vector<8x1xf32>
    %196 = vector.broadcast %195 : vector<8x1xf32> to vector<8x32xf32>
    %197 = arith.mulf %194, %196 : vector<8x32xf32>
    %198 = vector.extract_strided_slice %31 {offsets = [40, 0], sizes = [8, 96], strides = [1, 1]} : vector<64x96xf32> to vector<8x96xf32>
    %199 = arith.truncf %194 : vector<8x32xf32> to vector<8x32xbf16>
    %cst_39 = arith.constant dense<0.000000e+00> : vector<8x96xf32>
    %200 = tpu.matmul %199, %26, %cst_39 {dimension_numbers = #tpu.dot_dimension_numbers<[1], [0], [0], [1], [0, 0, 1, 1], [], []>} : vector<8x32xbf16>, vector<32x96xbf16>, vector<8x96xf32> -> vector<8x96xf32>
    %201 = arith.addf %200, %7 : vector<8x96xf32>
    %202 = vector.extract_strided_slice %198 {offsets = [0, 0], sizes = [8, 32], strides = [1, 1]} : vector<8x96xf32> to vector<8x32xf32>
    %203 = vector.extract_strided_slice %201 {offsets = [0, 0], sizes = [8, 32], strides = [1, 1]} : vector<8x96xf32> to vector<8x32xf32>
    %204 = arith.addf %202, %203 : vector<8x32xf32>
    %205 = arith.negf %204 : vector<8x32xf32>
    %206 = math.exp %205 : vector<8x32xf32>
    %cst_40 = arith.constant 1.000000e+00 : f32
    %207 = vector.broadcast %cst_40 : f32 to vector<8x32xf32>
    %208 = arith.addf %207, %206 : vector<8x32xf32>
    %209 = arith.divf %207, %208 : vector<8x32xf32>
    %210 = vector.extract_strided_slice %198 {offsets = [0, 32], sizes = [8, 32], strides = [1, 1]} : vector<8x96xf32> to vector<8x32xf32>
    %211 = vector.extract_strided_slice %201 {offsets = [0, 32], sizes = [8, 32], strides = [1, 1]} : vector<8x96xf32> to vector<8x32xf32>
    %212 = arith.addf %210, %211 : vector<8x32xf32>
    %213 = arith.negf %212 : vector<8x32xf32>
    %214 = math.exp %213 : vector<8x32xf32>
    %cst_41 = arith.constant 1.000000e+00 : f32
    %215 = vector.broadcast %cst_41 : f32 to vector<8x32xf32>
    %216 = arith.addf %215, %214 : vector<8x32xf32>
    %217 = arith.divf %215, %216 : vector<8x32xf32>
    %218 = vector.extract_strided_slice %198 {offsets = [0, 64], sizes = [8, 32], strides = [1, 1]} : vector<8x96xf32> to vector<8x32xf32>
    %219 = vector.extract_strided_slice %201 {offsets = [0, 64], sizes = [8, 32], strides = [1, 1]} : vector<8x96xf32> to vector<8x32xf32>
    %220 = arith.mulf %209, %219 : vector<8x32xf32>
    %221 = arith.addf %218, %220 : vector<8x32xf32>
    %222 = math.tanh %221 : vector<8x32xf32>
    %cst_42 = arith.constant 1.000000e+00 : f32
    %223 = vector.broadcast %cst_42 : f32 to vector<8x32xf32>
    %224 = arith.subf %223, %217 : vector<8x32xf32>
    %225 = arith.mulf %224, %222 : vector<8x32xf32>
    %226 = arith.mulf %217, %194 : vector<8x32xf32>
    %227 = arith.addf %225, %226 : vector<8x32xf32>
    %228 = vector.extract_strided_slice %0 {offsets = [0, 5], sizes = [8, 1], strides = [1, 1]} : vector<8x8xf32> to vector<8x1xf32>
    %229 = vector.broadcast %228 : vector<8x1xf32> to vector<8x32xf32>
    %230 = arith.mulf %227, %229 : vector<8x32xf32>
    %231 = vector.extract_strided_slice %31 {offsets = [48, 0], sizes = [8, 96], strides = [1, 1]} : vector<64x96xf32> to vector<8x96xf32>
    %232 = arith.truncf %227 : vector<8x32xf32> to vector<8x32xbf16>
    %cst_43 = arith.constant dense<0.000000e+00> : vector<8x96xf32>
    %233 = tpu.matmul %232, %26, %cst_43 {dimension_numbers = #tpu.dot_dimension_numbers<[1], [0], [0], [1], [0, 0, 1, 1], [], []>} : vector<8x32xbf16>, vector<32x96xbf16>, vector<8x96xf32> -> vector<8x96xf32>
    %234 = arith.addf %233, %7 : vector<8x96xf32>
    %235 = vector.extract_strided_slice %231 {offsets = [0, 0], sizes = [8, 32], strides = [1, 1]} : vector<8x96xf32> to vector<8x32xf32>
    %236 = vector.extract_strided_slice %234 {offsets = [0, 0], sizes = [8, 32], strides = [1, 1]} : vector<8x96xf32> to vector<8x32xf32>
    %237 = arith.addf %235, %236 : vector<8x32xf32>
    %238 = arith.negf %237 : vector<8x32xf32>
    %239 = math.exp %238 : vector<8x32xf32>
    %cst_44 = arith.constant 1.000000e+00 : f32
    %240 = vector.broadcast %cst_44 : f32 to vector<8x32xf32>
    %241 = arith.addf %240, %239 : vector<8x32xf32>
    %242 = arith.divf %240, %241 : vector<8x32xf32>
    %243 = vector.extract_strided_slice %231 {offsets = [0, 32], sizes = [8, 32], strides = [1, 1]} : vector<8x96xf32> to vector<8x32xf32>
    %244 = vector.extract_strided_slice %234 {offsets = [0, 32], sizes = [8, 32], strides = [1, 1]} : vector<8x96xf32> to vector<8x32xf32>
    %245 = arith.addf %243, %244 : vector<8x32xf32>
    %246 = arith.negf %245 : vector<8x32xf32>
    %247 = math.exp %246 : vector<8x32xf32>
    %cst_45 = arith.constant 1.000000e+00 : f32
    %248 = vector.broadcast %cst_45 : f32 to vector<8x32xf32>
    %249 = arith.addf %248, %247 : vector<8x32xf32>
    %250 = arith.divf %248, %249 : vector<8x32xf32>
    %251 = vector.extract_strided_slice %231 {offsets = [0, 64], sizes = [8, 32], strides = [1, 1]} : vector<8x96xf32> to vector<8x32xf32>
    %252 = vector.extract_strided_slice %234 {offsets = [0, 64], sizes = [8, 32], strides = [1, 1]} : vector<8x96xf32> to vector<8x32xf32>
    %253 = arith.mulf %242, %252 : vector<8x32xf32>
    %254 = arith.addf %251, %253 : vector<8x32xf32>
    %255 = math.tanh %254 : vector<8x32xf32>
    %cst_46 = arith.constant 1.000000e+00 : f32
    %256 = vector.broadcast %cst_46 : f32 to vector<8x32xf32>
    %257 = arith.subf %256, %250 : vector<8x32xf32>
    %258 = arith.mulf %257, %255 : vector<8x32xf32>
    %259 = arith.mulf %250, %227 : vector<8x32xf32>
    %260 = arith.addf %258, %259 : vector<8x32xf32>
    %261 = vector.extract_strided_slice %0 {offsets = [0, 6], sizes = [8, 1], strides = [1, 1]} : vector<8x8xf32> to vector<8x1xf32>
    %262 = vector.broadcast %261 : vector<8x1xf32> to vector<8x32xf32>
    %263 = arith.mulf %260, %262 : vector<8x32xf32>
    %264 = vector.extract_strided_slice %31 {offsets = [56, 0], sizes = [8, 96], strides = [1, 1]} : vector<64x96xf32> to vector<8x96xf32>
    %265 = arith.truncf %260 : vector<8x32xf32> to vector<8x32xbf16>
    %cst_47 = arith.constant dense<0.000000e+00> : vector<8x96xf32>
    %266 = tpu.matmul %265, %26, %cst_47 {dimension_numbers = #tpu.dot_dimension_numbers<[1], [0], [0], [1], [0, 0, 1, 1], [], []>} : vector<8x32xbf16>, vector<32x96xbf16>, vector<8x96xf32> -> vector<8x96xf32>
    %267 = arith.addf %266, %7 : vector<8x96xf32>
    %268 = vector.extract_strided_slice %264 {offsets = [0, 0], sizes = [8, 32], strides = [1, 1]} : vector<8x96xf32> to vector<8x32xf32>
    %269 = vector.extract_strided_slice %267 {offsets = [0, 0], sizes = [8, 32], strides = [1, 1]} : vector<8x96xf32> to vector<8x32xf32>
    %270 = arith.addf %268, %269 : vector<8x32xf32>
    %271 = arith.negf %270 : vector<8x32xf32>
    %272 = math.exp %271 : vector<8x32xf32>
    %cst_48 = arith.constant 1.000000e+00 : f32
    %273 = vector.broadcast %cst_48 : f32 to vector<8x32xf32>
    %274 = arith.addf %273, %272 : vector<8x32xf32>
    %275 = arith.divf %273, %274 : vector<8x32xf32>
    %276 = vector.extract_strided_slice %264 {offsets = [0, 32], sizes = [8, 32], strides = [1, 1]} : vector<8x96xf32> to vector<8x32xf32>
    %277 = vector.extract_strided_slice %267 {offsets = [0, 32], sizes = [8, 32], strides = [1, 1]} : vector<8x96xf32> to vector<8x32xf32>
    %278 = arith.addf %276, %277 : vector<8x32xf32>
    %279 = arith.negf %278 : vector<8x32xf32>
    %280 = math.exp %279 : vector<8x32xf32>
    %cst_49 = arith.constant 1.000000e+00 : f32
    %281 = vector.broadcast %cst_49 : f32 to vector<8x32xf32>
    %282 = arith.addf %281, %280 : vector<8x32xf32>
    %283 = arith.divf %281, %282 : vector<8x32xf32>
    %284 = vector.extract_strided_slice %264 {offsets = [0, 64], sizes = [8, 32], strides = [1, 1]} : vector<8x96xf32> to vector<8x32xf32>
    %285 = vector.extract_strided_slice %267 {offsets = [0, 64], sizes = [8, 32], strides = [1, 1]} : vector<8x96xf32> to vector<8x32xf32>
    %286 = arith.mulf %275, %285 : vector<8x32xf32>
    %287 = arith.addf %284, %286 : vector<8x32xf32>
    %288 = math.tanh %287 : vector<8x32xf32>
    %cst_50 = arith.constant 1.000000e+00 : f32
    %289 = vector.broadcast %cst_50 : f32 to vector<8x32xf32>
    %290 = arith.subf %289, %283 : vector<8x32xf32>
    %291 = arith.mulf %290, %288 : vector<8x32xf32>
    %292 = arith.mulf %283, %260 : vector<8x32xf32>
    %293 = arith.addf %291, %292 : vector<8x32xf32>
    %294 = vector.extract_strided_slice %0 {offsets = [0, 7], sizes = [8, 1], strides = [1, 1]} : vector<8x8xf32> to vector<8x1xf32>
    %295 = vector.broadcast %294 : vector<8x1xf32> to vector<8x32xf32>
    %296 = arith.mulf %293, %295 : vector<8x32xf32>
    %297 = tpu.concatenate %65, %98, %131, %164, %197, %230, %263, %296 in 0 : vector<8x32xf32>, vector<8x32xf32>, vector<8x32xf32>, vector<8x32xf32>, vector<8x32xf32>, vector<8x32xf32>, vector<8x32xf32>, vector<8x32xf32> -> vector<64x32xf32>
    %cst_51 = arith.constant dense<0.000000e+00> : vector<64x96xf32>
    %298 = tpu.matmul %297, %3, %cst_51 {dimension_numbers = #tpu.dot_dimension_numbers<[1], [0], [0], [1], [0, 0, 1, 1], [], []>} : vector<64x32xf32>, vector<32x96xf32>, vector<64x96xf32> -> vector<64x96xf32>
    %cst_52 = arith.constant 0.000000e+00 : f32
    %299 = vector.broadcast %cst_52 : f32 to vector<8x32xf32>
    %300 = arith.truncf %299 : vector<8x32xf32> to vector<8x32xbf16>
    %cst_53 = arith.constant dense<0.000000e+00> : vector<8x136xf32>
    %301 = tpu.matmul %300, %27, %cst_53 {dimension_numbers = #tpu.dot_dimension_numbers<[1], [0], [0], [1], [0, 0, 1, 1], [], []>} : vector<8x32xbf16>, vector<32x136xbf16>, vector<8x136xf32> -> vector<8x136xf32>
    %302 = vector.extract_strided_slice %301 {offsets = [0, 0], sizes = [8, 96], strides = [1, 1]} : vector<8x136xf32> to vector<8x96xf32>
    %303 = arith.addf %302, %10 : vector<8x96xf32>
    %304 = vector.extract_strided_slice %301 {offsets = [0, 128], sizes = [8, 8], strides = [1, 1]} : vector<8x136xf32> to vector<8x8xf32>
    %305 = arith.addf %304, %13 : vector<8x8xf32>
    %cst_54 = arith.constant dense<0xFF800000> : vector<8xf32>
    %306 = vector.multi_reduction <maximumf>, %305, %cst_54 [1] : vector<8x8xf32> to vector<8xf32>
    %307 = vector.shape_cast %306 : vector<8xf32> to vector<8x1xf32>
    %308 = vector.broadcast %307 : vector<8x1xf32> to vector<8x8xf32>
    %309 = arith.subf %305, %308 : vector<8x8xf32>
    %310 = math.exp %309 : vector<8x8xf32>
    %cst_55 = arith.constant dense<0.000000e+00> : vector<8xf32>
    %311 = vector.multi_reduction <add>, %310, %cst_55 [1] : vector<8x8xf32> to vector<8xf32>
    %312 = vector.shape_cast %311 : vector<8xf32> to vector<8x1xf32>
    %313 = tpu.reciprocal %312 {approx = true} : vector<8x1xf32> -> vector<8x1xf32>
    %314 = vector.broadcast %313 : vector<8x1xf32> to vector<8x8xf32>
    %315 = arith.mulf %310, %314 : vector<8x8xf32>
    %316 = vector.broadcast %1 : vector<8x1xf32> to vector<8x96xf32>
    %317 = arith.mulf %316, %19 : vector<8x96xf32>
    %318 = arith.addf %16, %317 : vector<8x96xf32>
    %319 = vector.extract_strided_slice %315 {offsets = [0, 0], sizes = [8, 1], strides = [1, 1]} : vector<8x8xf32> to vector<8x1xf32>
    %320 = vector.extract_strided_slice %298 {offsets = [0, 0], sizes = [8, 96], strides = [1, 1]} : vector<64x96xf32> to vector<8x96xf32>
    %321 = vector.broadcast %319 : vector<8x1xf32> to vector<8x96xf32>
    %322 = arith.mulf %321, %320 : vector<8x96xf32>
    %323 = arith.addf %318, %322 : vector<8x96xf32>
    %324 = vector.extract_strided_slice %315 {offsets = [0, 1], sizes = [8, 1], strides = [1, 1]} : vector<8x8xf32> to vector<8x1xf32>
    %325 = vector.extract_strided_slice %298 {offsets = [8, 0], sizes = [8, 96], strides = [1, 1]} : vector<64x96xf32> to vector<8x96xf32>
    %326 = vector.broadcast %324 : vector<8x1xf32> to vector<8x96xf32>
    %327 = arith.mulf %326, %325 : vector<8x96xf32>
    %328 = arith.addf %323, %327 : vector<8x96xf32>
    %329 = vector.extract_strided_slice %315 {offsets = [0, 2], sizes = [8, 1], strides = [1, 1]} : vector<8x8xf32> to vector<8x1xf32>
    %330 = vector.extract_strided_slice %298 {offsets = [16, 0], sizes = [8, 96], strides = [1, 1]} : vector<64x96xf32> to vector<8x96xf32>
    %331 = vector.broadcast %329 : vector<8x1xf32> to vector<8x96xf32>
    %332 = arith.mulf %331, %330 : vector<8x96xf32>
    %333 = arith.addf %328, %332 : vector<8x96xf32>
    %334 = vector.extract_strided_slice %315 {offsets = [0, 3], sizes = [8, 1], strides = [1, 1]} : vector<8x8xf32> to vector<8x1xf32>
    %335 = vector.extract_strided_slice %298 {offsets = [24, 0], sizes = [8, 96], strides = [1, 1]} : vector<64x96xf32> to vector<8x96xf32>
    %336 = vector.broadcast %334 : vector<8x1xf32> to vector<8x96xf32>
    %337 = arith.mulf %336, %335 : vector<8x96xf32>
    %338 = arith.addf %333, %337 : vector<8x96xf32>
    %339 = vector.extract_strided_slice %315 {offsets = [0, 4], sizes = [8, 1], strides = [1, 1]} : vector<8x8xf32> to vector<8x1xf32>
    %340 = vector.extract_strided_slice %298 {offsets = [32, 0], sizes = [8, 96], strides = [1, 1]} : vector<64x96xf32> to vector<8x96xf32>
    %341 = vector.broadcast %339 : vector<8x1xf32> to vector<8x96xf32>
    %342 = arith.mulf %341, %340 : vector<8x96xf32>
    %343 = arith.addf %338, %342 : vector<8x96xf32>
    %344 = vector.extract_strided_slice %315 {offsets = [0, 5], sizes = [8, 1], strides = [1, 1]} : vector<8x8xf32> to vector<8x1xf32>
    %345 = vector.extract_strided_slice %298 {offsets = [40, 0], sizes = [8, 96], strides = [1, 1]} : vector<64x96xf32> to vector<8x96xf32>
    %346 = vector.broadcast %344 : vector<8x1xf32> to vector<8x96xf32>
    %347 = arith.mulf %346, %345 : vector<8x96xf32>
    %348 = arith.addf %343, %347 : vector<8x96xf32>
    %349 = vector.extract_strided_slice %315 {offsets = [0, 6], sizes = [8, 1], strides = [1, 1]} : vector<8x8xf32> to vector<8x1xf32>
    %350 = vector.extract_strided_slice %298 {offsets = [48, 0], sizes = [8, 96], strides = [1, 1]} : vector<64x96xf32> to vector<8x96xf32>
    %351 = vector.broadcast %349 : vector<8x1xf32> to vector<8x96xf32>
    %352 = arith.mulf %351, %350 : vector<8x96xf32>
    %353 = arith.addf %348, %352 : vector<8x96xf32>
    %354 = vector.extract_strided_slice %315 {offsets = [0, 7], sizes = [8, 1], strides = [1, 1]} : vector<8x8xf32> to vector<8x1xf32>
    %355 = vector.extract_strided_slice %298 {offsets = [56, 0], sizes = [8, 96], strides = [1, 1]} : vector<64x96xf32> to vector<8x96xf32>
    %356 = vector.broadcast %354 : vector<8x1xf32> to vector<8x96xf32>
    %357 = arith.mulf %356, %355 : vector<8x96xf32>
    %358 = arith.addf %353, %357 : vector<8x96xf32>
    %359 = vector.extract_strided_slice %358 {offsets = [0, 0], sizes = [8, 32], strides = [1, 1]} : vector<8x96xf32> to vector<8x32xf32>
    %360 = vector.extract_strided_slice %303 {offsets = [0, 0], sizes = [8, 32], strides = [1, 1]} : vector<8x96xf32> to vector<8x32xf32>
    %361 = arith.addf %359, %360 : vector<8x32xf32>
    %362 = arith.negf %361 : vector<8x32xf32>
    %363 = math.exp %362 : vector<8x32xf32>
    %cst_56 = arith.constant 1.000000e+00 : f32
    %364 = vector.broadcast %cst_56 : f32 to vector<8x32xf32>
    %365 = arith.addf %364, %363 : vector<8x32xf32>
    %366 = arith.divf %364, %365 : vector<8x32xf32>
    %367 = vector.extract_strided_slice %358 {offsets = [0, 32], sizes = [8, 32], strides = [1, 1]} : vector<8x96xf32> to vector<8x32xf32>
    %368 = vector.extract_strided_slice %303 {offsets = [0, 32], sizes = [8, 32], strides = [1, 1]} : vector<8x96xf32> to vector<8x32xf32>
    %369 = arith.addf %367, %368 : vector<8x32xf32>
    %370 = arith.negf %369 : vector<8x32xf32>
    %371 = math.exp %370 : vector<8x32xf32>
    %cst_57 = arith.constant 1.000000e+00 : f32
    %372 = vector.broadcast %cst_57 : f32 to vector<8x32xf32>
    %373 = arith.addf %372, %371 : vector<8x32xf32>
    %374 = arith.divf %372, %373 : vector<8x32xf32>
    %375 = vector.extract_strided_slice %358 {offsets = [0, 64], sizes = [8, 32], strides = [1, 1]} : vector<8x96xf32> to vector<8x32xf32>
    %376 = vector.extract_strided_slice %303 {offsets = [0, 64], sizes = [8, 32], strides = [1, 1]} : vector<8x96xf32> to vector<8x32xf32>
    %377 = arith.mulf %366, %376 : vector<8x32xf32>
    %378 = arith.addf %375, %377 : vector<8x32xf32>
    %379 = math.tanh %378 : vector<8x32xf32>
    %cst_58 = arith.constant 1.000000e+00 : f32
    %380 = vector.broadcast %cst_58 : f32 to vector<8x32xf32>
    %381 = arith.subf %380, %374 : vector<8x32xf32>
    %382 = arith.mulf %381, %379 : vector<8x32xf32>
    %383 = arith.mulf %374, %299 : vector<8x32xf32>
    %384 = arith.addf %382, %383 : vector<8x32xf32>
    %385 = arith.mulf %384, %22 : vector<8x32xf32>
    %cst_59 = arith.constant dense<0.000000e+00> : vector<8xf32>
    %386 = vector.multi_reduction <add>, %385, %cst_59 [1] : vector<8x32xf32> to vector<8xf32>
    %387 = vector.shape_cast %386 : vector<8xf32> to vector<8x1xf32>
    %388 = arith.addf %387, %25 : vector<8x1xf32>
    %389 = arith.truncf %384 : vector<8x32xf32> to vector<8x32xbf16>
    %cst_60 = arith.constant dense<0.000000e+00> : vector<8x136xf32>
    %390 = tpu.matmul %389, %27, %cst_60 {dimension_numbers = #tpu.dot_dimension_numbers<[1], [0], [0], [1], [0, 0, 1, 1], [], []>} : vector<8x32xbf16>, vector<32x136xbf16>, vector<8x136xf32> -> vector<8x136xf32>
    %391 = vector.extract_strided_slice %390 {offsets = [0, 0], sizes = [8, 96], strides = [1, 1]} : vector<8x136xf32> to vector<8x96xf32>
    %392 = arith.addf %391, %10 : vector<8x96xf32>
    %393 = vector.extract_strided_slice %390 {offsets = [0, 128], sizes = [8, 8], strides = [1, 1]} : vector<8x136xf32> to vector<8x8xf32>
    %394 = arith.addf %393, %13 : vector<8x8xf32>
    %cst_61 = arith.constant dense<0xFF800000> : vector<8xf32>
    %395 = vector.multi_reduction <maximumf>, %394, %cst_61 [1] : vector<8x8xf32> to vector<8xf32>
    %396 = vector.shape_cast %395 : vector<8xf32> to vector<8x1xf32>
    %397 = vector.broadcast %396 : vector<8x1xf32> to vector<8x8xf32>
    %398 = arith.subf %394, %397 : vector<8x8xf32>
    %399 = math.exp %398 : vector<8x8xf32>
    %cst_62 = arith.constant dense<0.000000e+00> : vector<8xf32>
    %400 = vector.multi_reduction <add>, %399, %cst_62 [1] : vector<8x8xf32> to vector<8xf32>
    %401 = vector.shape_cast %400 : vector<8xf32> to vector<8x1xf32>
    %402 = tpu.reciprocal %401 {approx = true} : vector<8x1xf32> -> vector<8x1xf32>
    %403 = vector.broadcast %402 : vector<8x1xf32> to vector<8x8xf32>
    %404 = arith.mulf %399, %403 : vector<8x8xf32>
    %405 = vector.broadcast %388 : vector<8x1xf32> to vector<8x96xf32>
    %406 = arith.mulf %405, %19 : vector<8x96xf32>
    %407 = arith.addf %16, %406 : vector<8x96xf32>
    %408 = vector.extract_strided_slice %404 {offsets = [0, 0], sizes = [8, 1], strides = [1, 1]} : vector<8x8xf32> to vector<8x1xf32>
    %409 = vector.extract_strided_slice %298 {offsets = [0, 0], sizes = [8, 96], strides = [1, 1]} : vector<64x96xf32> to vector<8x96xf32>
    %410 = vector.broadcast %408 : vector<8x1xf32> to vector<8x96xf32>
    %411 = arith.mulf %410, %409 : vector<8x96xf32>
    %412 = arith.addf %407, %411 : vector<8x96xf32>
    %413 = vector.extract_strided_slice %404 {offsets = [0, 1], sizes = [8, 1], strides = [1, 1]} : vector<8x8xf32> to vector<8x1xf32>
    %414 = vector.extract_strided_slice %298 {offsets = [8, 0], sizes = [8, 96], strides = [1, 1]} : vector<64x96xf32> to vector<8x96xf32>
    %415 = vector.broadcast %413 : vector<8x1xf32> to vector<8x96xf32>
    %416 = arith.mulf %415, %414 : vector<8x96xf32>
    %417 = arith.addf %412, %416 : vector<8x96xf32>
    %418 = vector.extract_strided_slice %404 {offsets = [0, 2], sizes = [8, 1], strides = [1, 1]} : vector<8x8xf32> to vector<8x1xf32>
    %419 = vector.extract_strided_slice %298 {offsets = [16, 0], sizes = [8, 96], strides = [1, 1]} : vector<64x96xf32> to vector<8x96xf32>
    %420 = vector.broadcast %418 : vector<8x1xf32> to vector<8x96xf32>
    %421 = arith.mulf %420, %419 : vector<8x96xf32>
    %422 = arith.addf %417, %421 : vector<8x96xf32>
    %423 = vector.extract_strided_slice %404 {offsets = [0, 3], sizes = [8, 1], strides = [1, 1]} : vector<8x8xf32> to vector<8x1xf32>
    %424 = vector.extract_strided_slice %298 {offsets = [24, 0], sizes = [8, 96], strides = [1, 1]} : vector<64x96xf32> to vector<8x96xf32>
    %425 = vector.broadcast %423 : vector<8x1xf32> to vector<8x96xf32>
    %426 = arith.mulf %425, %424 : vector<8x96xf32>
    %427 = arith.addf %422, %426 : vector<8x96xf32>
    %428 = vector.extract_strided_slice %404 {offsets = [0, 4], sizes = [8, 1], strides = [1, 1]} : vector<8x8xf32> to vector<8x1xf32>
    %429 = vector.extract_strided_slice %298 {offsets = [32, 0], sizes = [8, 96], strides = [1, 1]} : vector<64x96xf32> to vector<8x96xf32>
    %430 = vector.broadcast %428 : vector<8x1xf32> to vector<8x96xf32>
    %431 = arith.mulf %430, %429 : vector<8x96xf32>
    %432 = arith.addf %427, %431 : vector<8x96xf32>
    %433 = vector.extract_strided_slice %404 {offsets = [0, 5], sizes = [8, 1], strides = [1, 1]} : vector<8x8xf32> to vector<8x1xf32>
    %434 = vector.extract_strided_slice %298 {offsets = [40, 0], sizes = [8, 96], strides = [1, 1]} : vector<64x96xf32> to vector<8x96xf32>
    %435 = vector.broadcast %433 : vector<8x1xf32> to vector<8x96xf32>
    %436 = arith.mulf %435, %434 : vector<8x96xf32>
    %437 = arith.addf %432, %436 : vector<8x96xf32>
    %438 = vector.extract_strided_slice %404 {offsets = [0, 6], sizes = [8, 1], strides = [1, 1]} : vector<8x8xf32> to vector<8x1xf32>
    %439 = vector.extract_strided_slice %298 {offsets = [48, 0], sizes = [8, 96], strides = [1, 1]} : vector<64x96xf32> to vector<8x96xf32>
    %440 = vector.broadcast %438 : vector<8x1xf32> to vector<8x96xf32>
    %441 = arith.mulf %440, %439 : vector<8x96xf32>
    %442 = arith.addf %437, %441 : vector<8x96xf32>
    %443 = vector.extract_strided_slice %404 {offsets = [0, 7], sizes = [8, 1], strides = [1, 1]} : vector<8x8xf32> to vector<8x1xf32>
    %444 = vector.extract_strided_slice %298 {offsets = [56, 0], sizes = [8, 96], strides = [1, 1]} : vector<64x96xf32> to vector<8x96xf32>
    %445 = vector.broadcast %443 : vector<8x1xf32> to vector<8x96xf32>
    %446 = arith.mulf %445, %444 : vector<8x96xf32>
    %447 = arith.addf %442, %446 : vector<8x96xf32>
    %448 = vector.extract_strided_slice %447 {offsets = [0, 0], sizes = [8, 32], strides = [1, 1]} : vector<8x96xf32> to vector<8x32xf32>
    %449 = vector.extract_strided_slice %392 {offsets = [0, 0], sizes = [8, 32], strides = [1, 1]} : vector<8x96xf32> to vector<8x32xf32>
    %450 = arith.addf %448, %449 : vector<8x32xf32>
    %451 = arith.negf %450 : vector<8x32xf32>
    %452 = math.exp %451 : vector<8x32xf32>
    %cst_63 = arith.constant 1.000000e+00 : f32
    %453 = vector.broadcast %cst_63 : f32 to vector<8x32xf32>
    %454 = arith.addf %453, %452 : vector<8x32xf32>
    %455 = arith.divf %453, %454 : vector<8x32xf32>
    %456 = vector.extract_strided_slice %447 {offsets = [0, 32], sizes = [8, 32], strides = [1, 1]} : vector<8x96xf32> to vector<8x32xf32>
    %457 = vector.extract_strided_slice %392 {offsets = [0, 32], sizes = [8, 32], strides = [1, 1]} : vector<8x96xf32> to vector<8x32xf32>
    %458 = arith.addf %456, %457 : vector<8x32xf32>
    %459 = arith.negf %458 : vector<8x32xf32>
    %460 = math.exp %459 : vector<8x32xf32>
    %cst_64 = arith.constant 1.000000e+00 : f32
    %461 = vector.broadcast %cst_64 : f32 to vector<8x32xf32>
    %462 = arith.addf %461, %460 : vector<8x32xf32>
    %463 = arith.divf %461, %462 : vector<8x32xf32>
    %464 = vector.extract_strided_slice %447 {offsets = [0, 64], sizes = [8, 32], strides = [1, 1]} : vector<8x96xf32> to vector<8x32xf32>
    %465 = vector.extract_strided_slice %392 {offsets = [0, 64], sizes = [8, 32], strides = [1, 1]} : vector<8x96xf32> to vector<8x32xf32>
    %466 = arith.mulf %455, %465 : vector<8x32xf32>
    %467 = arith.addf %464, %466 : vector<8x32xf32>
    %468 = math.tanh %467 : vector<8x32xf32>
    %cst_65 = arith.constant 1.000000e+00 : f32
    %469 = vector.broadcast %cst_65 : f32 to vector<8x32xf32>
    %470 = arith.subf %469, %463 : vector<8x32xf32>
    %471 = arith.mulf %470, %468 : vector<8x32xf32>
    %472 = arith.mulf %463, %384 : vector<8x32xf32>
    %473 = arith.addf %471, %472 : vector<8x32xf32>
    %474 = arith.mulf %473, %22 : vector<8x32xf32>
    %cst_66 = arith.constant dense<0.000000e+00> : vector<8xf32>
    %475 = vector.multi_reduction <add>, %474, %cst_66 [1] : vector<8x32xf32> to vector<8xf32>
    %476 = vector.shape_cast %475 : vector<8xf32> to vector<8x1xf32>
    %477 = arith.addf %476, %25 : vector<8x1xf32>
    %478 = arith.truncf %473 : vector<8x32xf32> to vector<8x32xbf16>
    %cst_67 = arith.constant dense<0.000000e+00> : vector<8x136xf32>
    %479 = tpu.matmul %478, %27, %cst_67 {dimension_numbers = #tpu.dot_dimension_numbers<[1], [0], [0], [1], [0, 0, 1, 1], [], []>} : vector<8x32xbf16>, vector<32x136xbf16>, vector<8x136xf32> -> vector<8x136xf32>
    %480 = vector.extract_strided_slice %479 {offsets = [0, 0], sizes = [8, 96], strides = [1, 1]} : vector<8x136xf32> to vector<8x96xf32>
    %481 = arith.addf %480, %10 : vector<8x96xf32>
    %482 = vector.extract_strided_slice %479 {offsets = [0, 128], sizes = [8, 8], strides = [1, 1]} : vector<8x136xf32> to vector<8x8xf32>
    %483 = arith.addf %482, %13 : vector<8x8xf32>
    %cst_68 = arith.constant dense<0xFF800000> : vector<8xf32>
    %484 = vector.multi_reduction <maximumf>, %483, %cst_68 [1] : vector<8x8xf32> to vector<8xf32>
    %485 = vector.shape_cast %484 : vector<8xf32> to vector<8x1xf32>
    %486 = vector.broadcast %485 : vector<8x1xf32> to vector<8x8xf32>
    %487 = arith.subf %483, %486 : vector<8x8xf32>
    %488 = math.exp %487 : vector<8x8xf32>
    %cst_69 = arith.constant dense<0.000000e+00> : vector<8xf32>
    %489 = vector.multi_reduction <add>, %488, %cst_69 [1] : vector<8x8xf32> to vector<8xf32>
    %490 = vector.shape_cast %489 : vector<8xf32> to vector<8x1xf32>
    %491 = tpu.reciprocal %490 {approx = true} : vector<8x1xf32> -> vector<8x1xf32>
    %492 = vector.broadcast %491 : vector<8x1xf32> to vector<8x8xf32>
    %493 = arith.mulf %488, %492 : vector<8x8xf32>
    %494 = vector.broadcast %477 : vector<8x1xf32> to vector<8x96xf32>
    %495 = arith.mulf %494, %19 : vector<8x96xf32>
    %496 = arith.addf %16, %495 : vector<8x96xf32>
    %497 = vector.extract_strided_slice %493 {offsets = [0, 0], sizes = [8, 1], strides = [1, 1]} : vector<8x8xf32> to vector<8x1xf32>
    %498 = vector.extract_strided_slice %298 {offsets = [0, 0], sizes = [8, 96], strides = [1, 1]} : vector<64x96xf32> to vector<8x96xf32>
    %499 = vector.broadcast %497 : vector<8x1xf32> to vector<8x96xf32>
    %500 = arith.mulf %499, %498 : vector<8x96xf32>
    %501 = arith.addf %496, %500 : vector<8x96xf32>
    %502 = vector.extract_strided_slice %493 {offsets = [0, 1], sizes = [8, 1], strides = [1, 1]} : vector<8x8xf32> to vector<8x1xf32>
    %503 = vector.extract_strided_slice %298 {offsets = [8, 0], sizes = [8, 96], strides = [1, 1]} : vector<64x96xf32> to vector<8x96xf32>
    %504 = vector.broadcast %502 : vector<8x1xf32> to vector<8x96xf32>
    %505 = arith.mulf %504, %503 : vector<8x96xf32>
    %506 = arith.addf %501, %505 : vector<8x96xf32>
    %507 = vector.extract_strided_slice %493 {offsets = [0, 2], sizes = [8, 1], strides = [1, 1]} : vector<8x8xf32> to vector<8x1xf32>
    %508 = vector.extract_strided_slice %298 {offsets = [16, 0], sizes = [8, 96], strides = [1, 1]} : vector<64x96xf32> to vector<8x96xf32>
    %509 = vector.broadcast %507 : vector<8x1xf32> to vector<8x96xf32>
    %510 = arith.mulf %509, %508 : vector<8x96xf32>
    %511 = arith.addf %506, %510 : vector<8x96xf32>
    %512 = vector.extract_strided_slice %493 {offsets = [0, 3], sizes = [8, 1], strides = [1, 1]} : vector<8x8xf32> to vector<8x1xf32>
    %513 = vector.extract_strided_slice %298 {offsets = [24, 0], sizes = [8, 96], strides = [1, 1]} : vector<64x96xf32> to vector<8x96xf32>
    %514 = vector.broadcast %512 : vector<8x1xf32> to vector<8x96xf32>
    %515 = arith.mulf %514, %513 : vector<8x96xf32>
    %516 = arith.addf %511, %515 : vector<8x96xf32>
    %517 = vector.extract_strided_slice %493 {offsets = [0, 4], sizes = [8, 1], strides = [1, 1]} : vector<8x8xf32> to vector<8x1xf32>
    %518 = vector.extract_strided_slice %298 {offsets = [32, 0], sizes = [8, 96], strides = [1, 1]} : vector<64x96xf32> to vector<8x96xf32>
    %519 = vector.broadcast %517 : vector<8x1xf32> to vector<8x96xf32>
    %520 = arith.mulf %519, %518 : vector<8x96xf32>
    %521 = arith.addf %516, %520 : vector<8x96xf32>
    %522 = vector.extract_strided_slice %493 {offsets = [0, 5], sizes = [8, 1], strides = [1, 1]} : vector<8x8xf32> to vector<8x1xf32>
    %523 = vector.extract_strided_slice %298 {offsets = [40, 0], sizes = [8, 96], strides = [1, 1]} : vector<64x96xf32> to vector<8x96xf32>
    %524 = vector.broadcast %522 : vector<8x1xf32> to vector<8x96xf32>
    %525 = arith.mulf %524, %523 : vector<8x96xf32>
    %526 = arith.addf %521, %525 : vector<8x96xf32>
    %527 = vector.extract_strided_slice %493 {offsets = [0, 6], sizes = [8, 1], strides = [1, 1]} : vector<8x8xf32> to vector<8x1xf32>
    %528 = vector.extract_strided_slice %298 {offsets = [48, 0], sizes = [8, 96], strides = [1, 1]} : vector<64x96xf32> to vector<8x96xf32>
    %529 = vector.broadcast %527 : vector<8x1xf32> to vector<8x96xf32>
    %530 = arith.mulf %529, %528 : vector<8x96xf32>
    %531 = arith.addf %526, %530 : vector<8x96xf32>
    %532 = vector.extract_strided_slice %493 {offsets = [0, 7], sizes = [8, 1], strides = [1, 1]} : vector<8x8xf32> to vector<8x1xf32>
    %533 = vector.extract_strided_slice %298 {offsets = [56, 0], sizes = [8, 96], strides = [1, 1]} : vector<64x96xf32> to vector<8x96xf32>
    %534 = vector.broadcast %532 : vector<8x1xf32> to vector<8x96xf32>
    %535 = arith.mulf %534, %533 : vector<8x96xf32>
    %536 = arith.addf %531, %535 : vector<8x96xf32>
    %537 = vector.extract_strided_slice %536 {offsets = [0, 0], sizes = [8, 32], strides = [1, 1]} : vector<8x96xf32> to vector<8x32xf32>
    %538 = vector.extract_strided_slice %481 {offsets = [0, 0], sizes = [8, 32], strides = [1, 1]} : vector<8x96xf32> to vector<8x32xf32>
    %539 = arith.addf %537, %538 : vector<8x32xf32>
    %540 = arith.negf %539 : vector<8x32xf32>
    %541 = math.exp %540 : vector<8x32xf32>
    %cst_70 = arith.constant 1.000000e+00 : f32
    %542 = vector.broadcast %cst_70 : f32 to vector<8x32xf32>
    %543 = arith.addf %542, %541 : vector<8x32xf32>
    %544 = arith.divf %542, %543 : vector<8x32xf32>
    %545 = vector.extract_strided_slice %536 {offsets = [0, 32], sizes = [8, 32], strides = [1, 1]} : vector<8x96xf32> to vector<8x32xf32>
    %546 = vector.extract_strided_slice %481 {offsets = [0, 32], sizes = [8, 32], strides = [1, 1]} : vector<8x96xf32> to vector<8x32xf32>
    %547 = arith.addf %545, %546 : vector<8x32xf32>
    %548 = arith.negf %547 : vector<8x32xf32>
    %549 = math.exp %548 : vector<8x32xf32>
    %cst_71 = arith.constant 1.000000e+00 : f32
    %550 = vector.broadcast %cst_71 : f32 to vector<8x32xf32>
    %551 = arith.addf %550, %549 : vector<8x32xf32>
    %552 = arith.divf %550, %551 : vector<8x32xf32>
    %553 = vector.extract_strided_slice %536 {offsets = [0, 64], sizes = [8, 32], strides = [1, 1]} : vector<8x96xf32> to vector<8x32xf32>
    %554 = vector.extract_strided_slice %481 {offsets = [0, 64], sizes = [8, 32], strides = [1, 1]} : vector<8x96xf32> to vector<8x32xf32>
    %555 = arith.mulf %544, %554 : vector<8x32xf32>
    %556 = arith.addf %553, %555 : vector<8x32xf32>
    %557 = math.tanh %556 : vector<8x32xf32>
    %cst_72 = arith.constant 1.000000e+00 : f32
    %558 = vector.broadcast %cst_72 : f32 to vector<8x32xf32>
    %559 = arith.subf %558, %552 : vector<8x32xf32>
    %560 = arith.mulf %559, %557 : vector<8x32xf32>
    %561 = arith.mulf %552, %473 : vector<8x32xf32>
    %562 = arith.addf %560, %561 : vector<8x32xf32>
    %563 = arith.mulf %562, %22 : vector<8x32xf32>
    %cst_73 = arith.constant dense<0.000000e+00> : vector<8xf32>
    %564 = vector.multi_reduction <add>, %563, %cst_73 [1] : vector<8x32xf32> to vector<8xf32>
    %565 = vector.shape_cast %564 : vector<8xf32> to vector<8x1xf32>
    %566 = arith.addf %565, %25 : vector<8x1xf32>
    %567 = arith.truncf %562 : vector<8x32xf32> to vector<8x32xbf16>
    %cst_74 = arith.constant dense<0.000000e+00> : vector<8x136xf32>
    %568 = tpu.matmul %567, %27, %cst_74 {dimension_numbers = #tpu.dot_dimension_numbers<[1], [0], [0], [1], [0, 0, 1, 1], [], []>} : vector<8x32xbf16>, vector<32x136xbf16>, vector<8x136xf32> -> vector<8x136xf32>
    %569 = vector.extract_strided_slice %568 {offsets = [0, 0], sizes = [8, 96], strides = [1, 1]} : vector<8x136xf32> to vector<8x96xf32>
    %570 = arith.addf %569, %10 : vector<8x96xf32>
    %571 = vector.extract_strided_slice %568 {offsets = [0, 128], sizes = [8, 8], strides = [1, 1]} : vector<8x136xf32> to vector<8x8xf32>
    %572 = arith.addf %571, %13 : vector<8x8xf32>
    %cst_75 = arith.constant dense<0xFF800000> : vector<8xf32>
    %573 = vector.multi_reduction <maximumf>, %572, %cst_75 [1] : vector<8x8xf32> to vector<8xf32>
    %574 = vector.shape_cast %573 : vector<8xf32> to vector<8x1xf32>
    %575 = vector.broadcast %574 : vector<8x1xf32> to vector<8x8xf32>
    %576 = arith.subf %572, %575 : vector<8x8xf32>
    %577 = math.exp %576 : vector<8x8xf32>
    %cst_76 = arith.constant dense<0.000000e+00> : vector<8xf32>
    %578 = vector.multi_reduction <add>, %577, %cst_76 [1] : vector<8x8xf32> to vector<8xf32>
    %579 = vector.shape_cast %578 : vector<8xf32> to vector<8x1xf32>
    %580 = tpu.reciprocal %579 {approx = true} : vector<8x1xf32> -> vector<8x1xf32>
    %581 = vector.broadcast %580 : vector<8x1xf32> to vector<8x8xf32>
    %582 = arith.mulf %577, %581 : vector<8x8xf32>
    %583 = vector.broadcast %566 : vector<8x1xf32> to vector<8x96xf32>
    %584 = arith.mulf %583, %19 : vector<8x96xf32>
    %585 = arith.addf %16, %584 : vector<8x96xf32>
    %586 = vector.extract_strided_slice %582 {offsets = [0, 0], sizes = [8, 1], strides = [1, 1]} : vector<8x8xf32> to vector<8x1xf32>
    %587 = vector.extract_strided_slice %298 {offsets = [0, 0], sizes = [8, 96], strides = [1, 1]} : vector<64x96xf32> to vector<8x96xf32>
    %588 = vector.broadcast %586 : vector<8x1xf32> to vector<8x96xf32>
    %589 = arith.mulf %588, %587 : vector<8x96xf32>
    %590 = arith.addf %585, %589 : vector<8x96xf32>
    %591 = vector.extract_strided_slice %582 {offsets = [0, 1], sizes = [8, 1], strides = [1, 1]} : vector<8x8xf32> to vector<8x1xf32>
    %592 = vector.extract_strided_slice %298 {offsets = [8, 0], sizes = [8, 96], strides = [1, 1]} : vector<64x96xf32> to vector<8x96xf32>
    %593 = vector.broadcast %591 : vector<8x1xf32> to vector<8x96xf32>
    %594 = arith.mulf %593, %592 : vector<8x96xf32>
    %595 = arith.addf %590, %594 : vector<8x96xf32>
    %596 = vector.extract_strided_slice %582 {offsets = [0, 2], sizes = [8, 1], strides = [1, 1]} : vector<8x8xf32> to vector<8x1xf32>
    %597 = vector.extract_strided_slice %298 {offsets = [16, 0], sizes = [8, 96], strides = [1, 1]} : vector<64x96xf32> to vector<8x96xf32>
    %598 = vector.broadcast %596 : vector<8x1xf32> to vector<8x96xf32>
    %599 = arith.mulf %598, %597 : vector<8x96xf32>
    %600 = arith.addf %595, %599 : vector<8x96xf32>
    %601 = vector.extract_strided_slice %582 {offsets = [0, 3], sizes = [8, 1], strides = [1, 1]} : vector<8x8xf32> to vector<8x1xf32>
    %602 = vector.extract_strided_slice %298 {offsets = [24, 0], sizes = [8, 96], strides = [1, 1]} : vector<64x96xf32> to vector<8x96xf32>
    %603 = vector.broadcast %601 : vector<8x1xf32> to vector<8x96xf32>
    %604 = arith.mulf %603, %602 : vector<8x96xf32>
    %605 = arith.addf %600, %604 : vector<8x96xf32>
    %606 = vector.extract_strided_slice %582 {offsets = [0, 4], sizes = [8, 1], strides = [1, 1]} : vector<8x8xf32> to vector<8x1xf32>
    %607 = vector.extract_strided_slice %298 {offsets = [32, 0], sizes = [8, 96], strides = [1, 1]} : vector<64x96xf32> to vector<8x96xf32>
    %608 = vector.broadcast %606 : vector<8x1xf32> to vector<8x96xf32>
    %609 = arith.mulf %608, %607 : vector<8x96xf32>
    %610 = arith.addf %605, %609 : vector<8x96xf32>
    %611 = vector.extract_strided_slice %582 {offsets = [0, 5], sizes = [8, 1], strides = [1, 1]} : vector<8x8xf32> to vector<8x1xf32>
    %612 = vector.extract_strided_slice %298 {offsets = [40, 0], sizes = [8, 96], strides = [1, 1]} : vector<64x96xf32> to vector<8x96xf32>
    %613 = vector.broadcast %611 : vector<8x1xf32> to vector<8x96xf32>
    %614 = arith.mulf %613, %612 : vector<8x96xf32>
    %615 = arith.addf %610, %614 : vector<8x96xf32>
    %616 = vector.extract_strided_slice %582 {offsets = [0, 6], sizes = [8, 1], strides = [1, 1]} : vector<8x8xf32> to vector<8x1xf32>
    %617 = vector.extract_strided_slice %298 {offsets = [48, 0], sizes = [8, 96], strides = [1, 1]} : vector<64x96xf32> to vector<8x96xf32>
    %618 = vector.broadcast %616 : vector<8x1xf32> to vector<8x96xf32>
    %619 = arith.mulf %618, %617 : vector<8x96xf32>
    %620 = arith.addf %615, %619 : vector<8x96xf32>
    %621 = vector.extract_strided_slice %582 {offsets = [0, 7], sizes = [8, 1], strides = [1, 1]} : vector<8x8xf32> to vector<8x1xf32>
    %622 = vector.extract_strided_slice %298 {offsets = [56, 0], sizes = [8, 96], strides = [1, 1]} : vector<64x96xf32> to vector<8x96xf32>
    %623 = vector.broadcast %621 : vector<8x1xf32> to vector<8x96xf32>
    %624 = arith.mulf %623, %622 : vector<8x96xf32>
    %625 = arith.addf %620, %624 : vector<8x96xf32>
    %626 = vector.extract_strided_slice %625 {offsets = [0, 0], sizes = [8, 32], strides = [1, 1]} : vector<8x96xf32> to vector<8x32xf32>
    %627 = vector.extract_strided_slice %570 {offsets = [0, 0], sizes = [8, 32], strides = [1, 1]} : vector<8x96xf32> to vector<8x32xf32>
    %628 = arith.addf %626, %627 : vector<8x32xf32>
    %629 = arith.negf %628 : vector<8x32xf32>
    %630 = math.exp %629 : vector<8x32xf32>
    %cst_77 = arith.constant 1.000000e+00 : f32
    %631 = vector.broadcast %cst_77 : f32 to vector<8x32xf32>
    %632 = arith.addf %631, %630 : vector<8x32xf32>
    %633 = arith.divf %631, %632 : vector<8x32xf32>
    %634 = vector.extract_strided_slice %625 {offsets = [0, 32], sizes = [8, 32], strides = [1, 1]} : vector<8x96xf32> to vector<8x32xf32>
    %635 = vector.extract_strided_slice %570 {offsets = [0, 32], sizes = [8, 32], strides = [1, 1]} : vector<8x96xf32> to vector<8x32xf32>
    %636 = arith.addf %634, %635 : vector<8x32xf32>
    %637 = arith.negf %636 : vector<8x32xf32>
    %638 = math.exp %637 : vector<8x32xf32>
    %cst_78 = arith.constant 1.000000e+00 : f32
    %639 = vector.broadcast %cst_78 : f32 to vector<8x32xf32>
    %640 = arith.addf %639, %638 : vector<8x32xf32>
    %641 = arith.divf %639, %640 : vector<8x32xf32>
    %642 = vector.extract_strided_slice %625 {offsets = [0, 64], sizes = [8, 32], strides = [1, 1]} : vector<8x96xf32> to vector<8x32xf32>
    %643 = vector.extract_strided_slice %570 {offsets = [0, 64], sizes = [8, 32], strides = [1, 1]} : vector<8x96xf32> to vector<8x32xf32>
    %644 = arith.mulf %633, %643 : vector<8x32xf32>
    %645 = arith.addf %642, %644 : vector<8x32xf32>
    %646 = math.tanh %645 : vector<8x32xf32>
    %cst_79 = arith.constant 1.000000e+00 : f32
    %647 = vector.broadcast %cst_79 : f32 to vector<8x32xf32>
    %648 = arith.subf %647, %641 : vector<8x32xf32>
    %649 = arith.mulf %648, %646 : vector<8x32xf32>
    %650 = arith.mulf %641, %562 : vector<8x32xf32>
    %651 = arith.addf %649, %650 : vector<8x32xf32>
    %652 = arith.mulf %651, %22 : vector<8x32xf32>
    %cst_80 = arith.constant dense<0.000000e+00> : vector<8xf32>
    %653 = vector.multi_reduction <add>, %652, %cst_80 [1] : vector<8x32xf32> to vector<8xf32>
    %654 = vector.shape_cast %653 : vector<8xf32> to vector<8x1xf32>
    %655 = arith.addf %654, %25 : vector<8x1xf32>
    %656 = tpu.concatenate %388, %477, %566, %655 in 1 : vector<8x1xf32>, vector<8x1xf32>, vector<8x1xf32>, vector<8x1xf32> -> vector<8x4xf32>
    %c0_81 = arith.constant 0 : index
    %c0_82 = arith.constant 0 : index
    %657 = vector.load %arg4[%c0_81, %c0_82] : memref<8x4xf32, #tpu.memory_space<vmem>>, vector<8x4xf32>
    tpu.vector_store %arg4[%c0_81, %c0_82], %656 {strides = array<i32>} : memref<8x4xf32, #tpu.memory_space<vmem>>, vector<8x4xf32>,
    return
  }
}

</mosaic_0001>

<llo_original>
// kernel: encoder_attention_decoder.1
$region0: #{encoder_attention_decoder.1}
  #allocation0 [shape = 'u32[]', space=smem, size = 0x4, offset = 0x4, fixed_abs, tag = 'smem constant byte address 0x4 - core index']
  #allocation1 [shape = 'u32[144,128]{1,0:T(1,128)}', space=vmem, size = 0x12000, scoped, tag = 'internal scratch']
  %s0 = inlined_call_operand.vmem [shape: f32[64,8], index: 0, kind: input, shape index: {}]
  %s1 = inlined_call_operand.vmem [shape: f32[8,16], index: 1, kind: input, shape index: {}]
  %s2 = inlined_call_operand.vmem [shape: bf16[32,264], index: 2, kind: input, shape index: {}]
  %s3 = inlined_call_operand.vmem [shape: f32[48,128], index: 3, kind: input, shape index: {}]
  %s4 = inlined_call_operand.vmem [shape: f32[8,4], index: 4, kind: output, shape index: {}]
  %s5 = sld [smem:[#allocation0]]
  $region26: #{encoder_attention_decoder.1} parent=0
    _
  %s7 = ssub.s32 1, %s5
  %s8 = scalar_select 0, %s7, %s5
  // Predicated region
  $region2: #{encoder_attention_decoder.1} parent=0 // pred_check
    _
  $region3: #{encoder_attention_decoder.1} parent=0 // pred_check_branch
    %10 = sbr.rel (0) target = $region5
  $region4: #{encoder_attention_decoder.1} parent=0 // pred_region
    _
  $region5: #{encoder_attention_decoder.1} parent=0 // pred_fallthru
    _
  // Predicated region
  $region6: #{encoder_attention_decoder.1} parent=0 // pred_check
    _
  $region7: #{encoder_attention_decoder.1} parent=0 // pred_check_branch
    %12 = sbr.rel (0) target = $region9
  $region8: #{encoder_attention_decoder.1} parent=0 // pred_region
    _
  $region9: #{encoder_attention_decoder.1} parent=0 // pred_fallthru
    _
  // Predicated region
  $region10: #{encoder_attention_decoder.1} parent=0 // pred_check
    _
  $region11: #{encoder_attention_decoder.1} parent=0 // pred_check_branch
    %14 = sbr.rel (0) target = $region13
  $region12: #{encoder_attention_decoder.1} parent=0 // pred_region
    _
  $region13: #{encoder_attention_decoder.1} parent=0 // pred_fallthru
    _
  // Predicated region
  $region14: #{encoder_attention_decoder.1} parent=0 // pred_check
    _
  $region15: #{encoder_attention_decoder.1} parent=0 // pred_check_branch
    %16 = sbr.rel (0) target = $region17
  $region16: #{encoder_attention_decoder.1} parent=0 // pred_region
    _
  $region17: #{encoder_attention_decoder.1} parent=0 // pred_fallthru
    _
  %v18 = vld [vmem:[%s1] sm:$0xff]
  %v19 = vld [vmem:[%s3] sm:$0xff]
  %v20 = vld [vmem:[%s3 + $0x8] sm:$0xff]
  %v21 = vld [vmem:[%s3 + $0x10] sm:$0xff]
  %v22 = vld [vmem:[%s3 + $0x18] sm:$0xff]
  %v23 = vld [vmem:[%s3 + $0x20] sm:$0xff]
  %v24 = vld [vmem:[%s3 + $0x28] sm:$0x1]
  %v25 = vld [vmem:[%s3 + $0x29] sm:$0x1]
  %v26 = vlaneseq
  %v27 = vshrl.u32 %v26, 7
  %v28 = vsub.s32 0, %v27
  %v29 = vrot.slane %v25, %v28
  %v30 = vld [vmem:[%s3 + $0x2a] sm:$0x1]
  %v31 = vlaneseq
  %v32 = vshrl.u32 %v31, 7
  %v33 = vsub.s32 0, %v32
  %v34 = vrot.slane %v30, %v33
  %v35 = vld [vmem:[%s3 + $0x2b] sm:$0x1]
  %v36 = vlaneseq
  %v37 = vshrl.u32 %v36, 7
  %v38 = vsub.s32 0, %v37
  %v39 = vrot.slane %v35, %v38
  %v40 = vld [vmem:[%s3 + $0x2c] sm:$0x1]
  %v41 = vlaneseq
  %v42 = vshrl.u32 %v41, 7
  %v43 = vsub.s32 0, %v42
  %v44 = vrot.slane %v40, %v43
  %v45 = vld [vmem:[%s3 + $0x2d] sm:$0x1]
  %v46 = vlaneseq
  %v47 = vshrl.u32 %v46, 7
  %v48 = vsub.s32 0, %v47
  %v49 = vrot.slane %v45, %v48
  %v50 = vld [vmem:[%s3 + $0x2e] sm:$0x1]
  %v51 = vlaneseq
  %v52 = vshrl.u32 %v51, 7
  %v53 = vsub.s32 0, %v52
  %v54 = vrot.slane %v50, %v53
  %v55 = vld [vmem:[%s3 + $0x2f] sm:$0x1]
  %v56 = vlaneseq
  %v57 = vshrl.u32 %v56, 7
  %v58 = vsub.s32 0, %v57
  %v59 = vrot.slane %v55, %v58
  %v60 = vld [vmem:[%s2] sm:$0xf]
  %v61 = vld [vmem:[%s2 + $0xc] sm:$0xf]
  %v62 = vld [vmem:[%s2 + $0x18] sm:$0xf]
  %v63 = vld [vmem:[%s2 + $0x24] sm:$0xf]
  %v64 = vld [vmem:[%s2 + $0x4] sm:$0xff]
  %v65 = vld [vmem:[%s2 + $0x10] sm:$0xff]
  %v66 = vld [vmem:[%s2 + $0x1c] sm:$0xff]
  %v67 = vld [vmem:[%s2 + $0x28] sm:$0xff]
  %v68 = vld [vmem:[%s0] sm:$0xff]
  %v69 = vld [vmem:[%s0 + $0x8] sm:$0xff]
  %v70 = vld [vmem:[%s0 + $0x10] sm:$0xff]
  %v71 = vld [vmem:[%s0 + $0x18] sm:$0xff]
  %v72 = vld [vmem:[%s0 + $0x20] sm:$0xff]
  %v73 = vld [vmem:[%s0 + $0x28] sm:$0xff]
  %v74 = vld [vmem:[%s0 + $0x30] sm:$0xff]
  %v75 = vld [vmem:[%s0 + $0x38] sm:$0xff]
  %v76 = vlaneseq
  %v77 = vshrl.u32 %v76, 7
  %v78 = vsub.s32 0, %v77
  %v79 = vrot.slane %v24, %v78
  %vm80 = vcmask 64512
  %v82 = vsel %vm80, %v68, 0
  %v85 = vsel %vm80, %v69, 0
  %v88 = vsel %vm80, %v70, 0
  %v91 = vsel %vm80, %v71, 0
  %v94 = vsel %vm80, %v72, 0
  %v97 = vsel %vm80, %v73, 0
  %v100 = vsel %vm80, %v74, 0
  %v103 = vsel %vm80, %v75, 0
  %105 = vmatprep.subr.mxu0 0.0
  %106 = vmatpush1.msra.mxu0 0.0
  %107 = vmatprep.subr.mxu0 0.0
  %108 = vmatpush1.msra.mxu0 0.0
  %109 = vmatprep.subr.mxu0 0.0
  %110 = vmatpush1.msra.mxu0 0.0
  %111 = vmatprep.subr.mxu0 0.0
  %112 = vmatpush1.msra.mxu0 0.0
  %113 = vmatprep.subr.mxu0 0.0
  %114 = vmatpush1.msra.mxu0 0.0
  %115 = vmatprep.subr.mxu0 0.0
  %116 = vmatpush1.msra.mxu0 0.0
  %117 = vmatprep.subr.mxu0 0.0
  %118 = vmatpush1.msra.mxu0 0.0
  %119 = vmatprep.subr.mxu0 0.0
  %120 = vmatpush1.msra.mxu0 0.0
  %121 = vmatprep.subr.mxu0 0.0
  %122 = vmatpush1.msra.mxu0 0.0
  %123 = vmatprep.subr.mxu0 0.0
  %124 = vmatpush1.msra.mxu0 0.0
  %125 = vmatprep.subr.mxu0 0.0
  %126 = vmatpush1.msra.mxu0 0.0
  %127 = vmatprep.subr.mxu0 0.0
  %128 = vmatpush1.msra.mxu0 0.0
  %129 = vmatprep.subr.mxu0 0.0
  %130 = vmatpush1.msra.mxu0 0.0
  %131 = vmatprep.subr.mxu0 0.0
  %132 = vmatpush1.msra.mxu0 0.0
  %133 = vmatprep.subr.mxu0 0.0
  %134 = vmatpush1.msra.mxu0 0.0
  %135 = vmatprep.subr.mxu0 0.0
  %136 = vmatpush1.msra.mxu0 %v19
  %137 = vmatprep.subr.mxu0 0.0
  %138 = vmatpush2.msra.mxu0 0.0
  %139 = vmatprep.subr.mxu0 0.0
  %140 = vmatpush2.msra.mxu0 0.0
  %141 = vmatprep.subr.mxu0 0.0
  %142 = vmatpush2.msra.mxu0 0.0
  %143 = vmatprep.subr.mxu0 0.0
  %144 = vmatpush2.msra.mxu0 0.0
  %145 = vmatprep.subr.mxu0 0.0
  %146 = vmatpush2.msra.mxu0 0.0
  %147 = vmatprep.subr.mxu0 0.0
  %148 = vmatpush2.msra.mxu0 0.0
  %149 = vmatprep.subr.mxu0 0.0
  %150 = vmatpush2.msra.mxu0 0.0
  %151 = vmatprep.subr.mxu0 0.0
  %152 = vmatpush2.msra.mxu0 0.0
  %153 = vmatprep.subr.mxu0 0.0
  %154 = vmatpush2.msra.mxu0 0.0
  %155 = vmatprep.subr.mxu0 0.0
  %156 = vmatpush2.msra.mxu0 0.0
  %157 = vmatprep.subr.mxu0 0.0
  %158 = vmatpush2.msra.mxu0 0.0
  %159 = vmatprep.subr.mxu0 0.0
  %160 = vmatpush2.msra.mxu0 0.0
  %161 = vmatprep.subr.mxu0 0.0
  %162 = vmatpush2.msra.mxu0 0.0
  %163 = vmatprep.subr.mxu0 0.0
  %164 = vmatpush2.msra.mxu0 0.0
  %165 = vmatprep.subr.mxu0 0.0
  %166 = vmatpush2.msra.mxu0 0.0
  %167 = vmatprep.subr.mxu0 0.0
  %168 = vmatpush2.msra.mxu0 0.0
  %169 = vmatprep.mubr.f32.mxu0 0.0
  %170 = vmatmul.mubr.f32.gmra.mxu0 %v82
  %v171 = vpop.f32.mrf.mxu0
  %v172 = vadd.f32 %v79, %v171
  %v173 = vpop.f32.mrf.mxu0
  %174 = vmatprep.mubr.f32.mxu0 0.0
  %175 = vmatmul.mubr.f32.gmra.mxu0 %v85
  %v176 = vpop.f32.mrf.mxu0
  %v177 = vadd.f32 %v79, %v176
  %v178 = vpop.f32.mrf.mxu0
  %179 = vmatprep.mubr.f32.mxu0 0.0
  %180 = vmatmul.mubr.f32.gmra.mxu0 %v88
  %v181 = vpop.f32.mrf.mxu0
  %v182 = vadd.f32 %v79, %v181
  %v183 = vpop.f32.mrf.mxu0
  %184 = vmatprep.mubr.f32.mxu0 0.0
  %185 = vmatmul.mubr.f32.gmra.mxu0 %v91
  %v186 = vpop.f32.mrf.mxu0
  %v187 = vadd.f32 %v79, %v186
  %v188 = vpop.f32.mrf.mxu0
  %189 = vmatprep.mubr.f32.mxu0 0.0
  %190 = vmatmul.mubr.f32.gmra.mxu0 %v94
  %v191 = vpop.f32.mrf.mxu0
  %v192 = vadd.f32 %v79, %v191
  %v193 = vpop.f32.mrf.mxu0
  %194 = vmatprep.mubr.f32.mxu0 0.0
  %195 = vmatmul.mubr.f32.gmra.mxu0 %v97
  %v196 = vpop.f32.mrf.mxu0
  %v197 = vadd.f32 %v79, %v196
  %v198 = vpop.f32.mrf.mxu0
  %199 = vmatprep.mubr.f32.mxu0 0.0
  %200 = vmatmul.mubr.f32.gmra.mxu0 %v100
  %v201 = vpop.f32.mrf.mxu0
  %v202 = vadd.f32 %v79, %v201
  %v203 = vpop.f32.mrf.mxu0
  %204 = vmatprep.mubr.f32.mxu0 0.0
  %205 = vmatmul.mubr.f32.gmra.mxu0 %v103
  %v206 = vpop.f32.mrf.mxu0
  %v207 = vadd.f32 %v79, %v206
  %v208 = vpop.f32.mrf.mxu0
  %209 = vdwg.mxu0
  %v214 = vunpack.c.l.b16 %v60
  %v215 = vunpack.c.l.b16 %v61
  %v216 = vunpack.c.l.b16 %v62
  %v217 = vunpack.c.l.b16 %v63
  %v218 = vpack.c.b16 %v215, %v214
  %v219 = vpack.c.b16 %v217, %v216
  %vm222 = vcmask 261120
  %v224 = vsel %vm222, 0, 0
  %226 = vmatprep.subr.bf16.mxu0 0
  %227 = vmatpush1.bf16.msra.mxu0 0
  %228 = vmatprep.subr.bf16.mxu0 0
  %229 = vmatpush1.bf16.msra.mxu0 0
  %230 = vmatprep.subr.bf16.mxu0 0
  %231 = vmatpush1.bf16.msra.mxu0 0
  %232 = vmatprep.subr.bf16.mxu0 0
  %233 = vmatpush1.bf16.msra.mxu0 0
  %234 = vmatprep.subr.bf16.mxu0 0
  %235 = vmatpush1.bf16.msra.mxu0 0
  %236 = vmatprep.subr.bf16.mxu0 0
  %237 = vmatpush1.bf16.msra.mxu0 0
  %238 = vmatprep.subr.bf16.mxu0 0
  %239 = vmatpush1.bf16.msra.mxu0 %v219
  %240 = vmatprep.subr.bf16.mxu0 0
  %241 = vmatpush1.bf16.msra.mxu0 %v218
  %242 = vmatprep.subr.bf16.mxu0 0
  %243 = vmatpush2.bf16.msra.mxu0 0
  %244 = vmatprep.subr.bf16.mxu0 0
  %245 = vmatpush2.bf16.msra.mxu0 0
  %246 = vmatprep.subr.bf16.mxu0 0
  %247 = vmatpush2.bf16.msra.mxu0 0
  %248 = vmatprep.subr.bf16.mxu0 0
  %249 = vmatpush2.bf16.msra.mxu0 0
  %250 = vmatprep.subr.bf16.mxu0 0
  %251 = vmatpush2.bf16.msra.mxu0 0
  %252 = vmatprep.subr.bf16.mxu0 0
  %253 = vmatpush2.bf16.msra.mxu0 0
  %254 = vmatprep.subr.bf16.mxu0 0
  %255 = vmatpush2.bf16.msra.mxu0 0
  %256 = vmatprep.subr.bf16.mxu0 0
  %257 = vmatpush2.bf16.msra.mxu0 0
  %258 = vmatprep.mubr.bf16.mxu0 0
  %259 = vmatmul.mubr.bf16.gmra.mxu0 %v224
  %v260 = vpop.f32.mrf.mxu0
  %v261 = vadd.f32 %v29, %v260
  %v262 = vpop.f32.mrf.mxu0
  %v263 = vpop.f32.mrf.mxu0
  %v264 = vpop.f32.mrf.mxu0
  %265 = vdwg.mxu0
  %v266 = vadd.f32 %v172, %v261
  %v267 = vxor.u32 %v266, 2147483648
  %v268 = vmul.f32 %v267, 1.442695
  %v269 = vpow.pop %v268
  %v270 = vadd.f32 %v269, 1.0
  %v271 = vrcp.pop %v270
  %v272 = vmul.f32 1.0, %v271
  %274 = vrot.lane.b32.xlu0 %v261, 64
  %v275 = vpop.permute.xlu0 %274
  %v277 = vmul.f32 %v272, %v275
  %279 = vrot.lane.b32.xlu0 %v277, 64
  %v280 = vpop.permute.xlu0 %279
  %v282 = vadd.f32 %v172, %v280
  %v283 = vtanh.pop %v282
  %v284 = vsub.f32 1.0, %v272
  %286 = vrot.lane.b32.xlu0 %v283, 96
  %v287 = vpop.permute.xlu0 %286
  %v289 = vmul.f32 %v284, %v287
  %v290 = vmul.f32 %v272, 0.0
  %v291 = vadd.f32 %v289, %v290
  %293 = vset.pattern.permute.xlu0 0
  %294 = vperm.xlu0 %293, %v18
  %v295 = vpop.permute.xlu0 %294
  %v297 = vmul.f32 %v291, %v295
  %v298 = vpack.c.bf16 %v291, %v291
  %300 = vrot.lane.b32.xlu0 %v298, 96
  %v301 = vpop.permute.xlu0 %300
  %v303 = vsel %vm222, %v301, 0
  %305 = vmatprep.subr.bf16.mxu0 0
  %306 = vmatpush1.bf16.msra.mxu0 0
  %307 = vmatprep.subr.bf16.mxu0 0
  %308 = vmatpush1.bf16.msra.mxu0 0
  %309 = vmatprep.subr.bf16.mxu0 0
  %310 = vmatpush1.bf16.msra.mxu0 0
  %311 = vmatprep.subr.bf16.mxu0 0
  %312 = vmatpush1.bf16.msra.mxu0 0
  %313 = vmatprep.subr.bf16.mxu0 0
  %314 = vmatpush1.bf16.msra.mxu0 0
  %315 = vmatprep.subr.bf16.mxu0 0
  %316 = vmatpush1.bf16.msra.mxu0 0
  %317 = vmatprep.subr.bf16.mxu0 0
  %318 = vmatpush1.bf16.msra.mxu0 %v219
  %319 = vmatprep.subr.bf16.mxu0 0
  %320 = vmatpush1.bf16.msra.mxu0 %v218
  %321 = vmatprep.subr.bf16.mxu0 0
  %322 = vmatpush2.bf16.msra.mxu0 0
  %323 = vmatprep.subr.bf16.mxu0 0
  %324 = vmatpush2.bf16.msra.mxu0 0
  %325 = vmatprep.subr.bf16.mxu0 0
  %326 = vmatpush2.bf16.msra.mxu0 0
  %327 = vmatprep.subr.bf16.mxu0 0
  %328 = vmatpush2.bf16.msra.mxu0 0
  %329 = vmatprep.subr.bf16.mxu0 0
  %330 = vmatpush2.bf16.msra.mxu0 0
  %331 = vmatprep.subr.bf16.mxu0 0
  %332 = vmatpush2.bf16.msra.mxu0 0
  %333 = vmatprep.subr.bf16.mxu0 0
  %334 = vmatpush2.bf16.msra.mxu0 0
  %335 = vmatprep.subr.bf16.mxu0 0
  %336 = vmatpush2.bf16.msra.mxu0 0
  %337 = vmatprep.mubr.bf16.mxu0 0
  %338 = vmatmul.mubr.bf16.gmra.mxu0 %v303
  %v339 = vpop.f32.mrf.mxu0
  %v340 = vadd.f32 %v29, %v339
  %v341 = vpop.f32.mrf.mxu0
  %v342 = vpop.f32.mrf.mxu0
  %v343 = vpop.f32.mrf.mxu0
  %344 = vdwg.mxu0
  %v345 = vadd.f32 %v177, %v340
  %v346 = vxor.u32 %v345, 2147483648
  %v347 = vmul.f32 %v346, 1.442695
  %v348 = vpow.pop %v347
  %v349 = vadd.f32 %v348, 1.0
  %v350 = vrcp.pop %v349
  %v351 = vmul.f32 1.0, %v350
  %353 = vrot.lane.b32.xlu0 %v340, 64
  %v354 = vpop.permute.xlu0 %353
  %v356 = vmul.f32 %v351, %v354
  %358 = vrot.lane.b32.xlu0 %v356, 64
  %v359 = vpop.permute.xlu0 %358
  %v361 = vadd.f32 %v177, %v359
  %v362 = vtanh.pop %v361
  %v363 = vsub.f32 1.0, %v351
  %365 = vrot.lane.b32.xlu0 %v362, 96
  %v366 = vpop.permute.xlu0 %365
  %v368 = vmul.f32 %v363, %v366
  %v369 = vmul.f32 %v351, %v291
  %v370 = vadd.f32 %v368, %v369
  %371 = vset.pattern.permute.xlu0 1
  %372 = vperm.xlu0 %371, %v18
  %v373 = vpop.permute.xlu0 %372
  %v375 = vmul.f32 %v370, %v373
  %v376 = vpack.c.bf16 %v370, %v370
  %378 = vrot.lane.b32.xlu0 %v376, 96
  %v379 = vpop.permute.xlu0 %378
  %v381 = vsel %vm222, %v379, 0
  %383 = vmatprep.subr.bf16.mxu0 0
  %384 = vmatpush1.bf16.msra.mxu0 0
  %385 = vmatprep.subr.bf16.mxu0 0
  %386 = vmatpush1.bf16.msra.mxu0 0
  %387 = vmatprep.subr.bf16.mxu0 0
  %388 = vmatpush1.bf16.msra.mxu0 0
  %389 = vmatprep.subr.bf16.mxu0 0
  %390 = vmatpush1.bf16.msra.mxu0 0
  %391 = vmatprep.subr.bf16.mxu0 0
  %392 = vmatpush1.bf16.msra.mxu0 0
  %393 = vmatprep.subr.bf16.mxu0 0
  %394 = vmatpush1.bf16.msra.mxu0 0
  %395 = vmatprep.subr.bf16.mxu0 0
  %396 = vmatpush1.bf16.msra.mxu0 %v219
  %397 = vmatprep.subr.bf16.mxu0 0
  %398 = vmatpush1.bf16.msra.mxu0 %v218
  %399 = vmatprep.subr.bf16.mxu0 0
  %400 = vmatpush2.bf16.msra.mxu0 0
  %401 = vmatprep.subr.bf16.mxu0 0
  %402 = vmatpush2.bf16.msra.mxu0 0
  %403 = vmatprep.subr.bf16.mxu0 0
  %404 = vmatpush2.bf16.msra.mxu0 0
  %405 = vmatprep.subr.bf16.mxu0 0
  %406 = vmatpush2.bf16.msra.mxu0 0
  %407 = vmatprep.subr.bf16.mxu0 0
  %408 = vmatpush2.bf16.msra.mxu0 0
  %409 = vmatprep.subr.bf16.mxu0 0
  %410 = vmatpush2.bf16.msra.mxu0 0
  %411 = vmatprep.subr.bf16.mxu0 0
  %412 = vmatpush2.bf16.msra.mxu0 0
  %413 = vmatprep.subr.bf16.mxu0 0
  %414 = vmatpush2.bf16.msra.mxu0 0
  %415 = vmatprep.mubr.bf16.mxu0 0
  %416 = vmatmul.mubr.bf16.gmra.mxu0 %v381
  %v417 = vpop.f32.mrf.mxu0
  %v418 = vadd.f32 %v29, %v417
  %v419 = vpop.f32.mrf.mxu0
  %v420 = vpop.f32.mrf.mxu0
  %v421 = vpop.f32.mrf.mxu0
  %422 = vdwg.mxu0
  %v423 = vadd.f32 %v182, %v418
  %v424 = vxor.u32 %v423, 2147483648
  %v425 = vmul.f32 %v424, 1.442695
  %v426 = vpow.pop %v425
  %v427 = vadd.f32 %v426, 1.0
  %v428 = vrcp.pop %v427
  %v429 = vmul.f32 1.0, %v428
  %431 = vrot.lane.b32.xlu0 %v418, 64
  %v432 = vpop.permute.xlu0 %431
  %v434 = vmul.f32 %v429, %v432
  %436 = vrot.lane.b32.xlu0 %v434, 64
  %v437 = vpop.permute.xlu0 %436
  %v439 = vadd.f32 %v182, %v437
  %v440 = vtanh.pop %v439
  %v441 = vsub.f32 1.0, %v429
  %443 = vrot.lane.b32.xlu0 %v440, 96
  %v444 = vpop.permute.xlu0 %443
  %v446 = vmul.f32 %v441, %v444
  %v447 = vmul.f32 %v429, %v370
  %v448 = vadd.f32 %v446, %v447
  %449 = vset.pattern.permute.xlu0 2
  %450 = vperm.xlu0 %449, %v18
  %v451 = vpop.permute.xlu0 %450
  %v453 = vmul.f32 %v448, %v451
  %v454 = vpack.c.bf16 %v448, %v448
  %456 = vrot.lane.b32.xlu0 %v454, 96
  %v457 = vpop.permute.xlu0 %456
  %v459 = vsel %vm222, %v457, 0
  %461 = vmatprep.subr.bf16.mxu0 0
  %462 = vmatpush1.bf16.msra.mxu0 0
  %463 = vmatprep.subr.bf16.mxu0 0
  %464 = vmatpush1.bf16.msra.mxu0 0
  %465 = vmatprep.subr.bf16.mxu0 0
  %466 = vmatpush1.bf16.msra.mxu0 0
  %467 = vmatprep.subr.bf16.mxu0 0
  %468 = vmatpush1.bf16.msra.mxu0 0
  %469 = vmatprep.subr.bf16.mxu0 0
  %470 = vmatpush1.bf16.msra.mxu0 0
  %471 = vmatprep.subr.bf16.mxu0 0
  %472 = vmatpush1.bf16.msra.mxu0 0
  %473 = vmatprep.subr.bf16.mxu0 0
  %474 = vmatpush1.bf16.msra.mxu0 %v219
  %475 = vmatprep.subr.bf16.mxu0 0
  %476 = vmatpush1.bf16.msra.mxu0 %v218
  %477 = vmatprep.subr.bf16.mxu0 0
  %478 = vmatpush2.bf16.msra.mxu0 0
  %479 = vmatprep.subr.bf16.mxu0 0
  %480 = vmatpush2.bf16.msra.mxu0 0
  %481 = vmatprep.subr.bf16.mxu0 0
  %482 = vmatpush2.bf16.msra.mxu0 0
  %483 = vmatprep.subr.bf16.mxu0 0
  %484 = vmatpush2.bf16.msra.mxu0 0
  %485 = vmatprep.subr.bf16.mxu0 0
  %486 = vmatpush2.bf16.msra.mxu0 0
  %487 = vmatprep.subr.bf16.mxu0 0
  %488 = vmatpush2.bf16.msra.mxu0 0
  %489 = vmatprep.subr.bf16.mxu0 0
  %490 = vmatpush2.bf16.msra.mxu0 0
  %491 = vmatprep.subr.bf16.mxu0 0
  %492 = vmatpush2.bf16.msra.mxu0 0
  %493 = vmatprep.mubr.bf16.mxu0 0
  %494 = vmatmul.mubr.bf16.gmra.mxu0 %v459
  %v495 = vpop.f32.mrf.mxu0
  %v496 = vadd.f32 %v29, %v495
  %v497 = vpop.f32.mrf.mxu0
  %v498 = vpop.f32.mrf.mxu0
  %v499 = vpop.f32.mrf.mxu0
  %500 = vdwg.mxu0
  %v501 = vadd.f32 %v187, %v496
  %v502 = vxor.u32 %v501, 2147483648
  %v503 = vmul.f32 %v502, 1.442695
  %v504 = vpow.pop %v503
  %v505 = vadd.f32 %v504, 1.0
  %v506 = vrcp.pop %v505
  %v507 = vmul.f32 1.0, %v506
  %509 = vrot.lane.b32.xlu0 %v496, 64
  %v510 = vpop.permute.xlu0 %509
  %v512 = vmul.f32 %v507, %v510
  %514 = vrot.lane.b32.xlu0 %v512, 64
  %v515 = vpop.permute.xlu0 %514
  %v517 = vadd.f32 %v187, %v515
  %v518 = vtanh.pop %v517
  %v519 = vsub.f32 1.0, %v507
  %521 = vrot.lane.b32.xlu0 %v518, 96
  %v522 = vpop.permute.xlu0 %521
  %v524 = vmul.f32 %v519, %v522
  %v525 = vmul.f32 %v507, %v448
  %v526 = vadd.f32 %v524, %v525
  %527 = vset.pattern.permute.xlu0 3
  %528 = vperm.xlu0 %527, %v18
  %v529 = vpop.permute.xlu0 %528
  %v531 = vmul.f32 %v526, %v529
  %v532 = vpack.c.bf16 %v526, %v526
  %534 = vrot.lane.b32.xlu0 %v532, 96
  %v535 = vpop.permute.xlu0 %534
  %v537 = vsel %vm222, %v535, 0
  %539 = vmatprep.subr.bf16.mxu0 0
  %540 = vmatpush1.bf16.msra.mxu0 0
  %541 = vmatprep.subr.bf16.mxu0 0
  %542 = vmatpush1.bf16.msra.mxu0 0
  %543 = vmatprep.subr.bf16.mxu0 0
  %544 = vmatpush1.bf16.msra.mxu0 0
  %545 = vmatprep.subr.bf16.mxu0 0
  %546 = vmatpush1.bf16.msra.mxu0 0
  %547 = vmatprep.subr.bf16.mxu0 0
  %548 = vmatpush1.bf16.msra.mxu0 0
  %549 = vmatprep.subr.bf16.mxu0 0
  %550 = vmatpush1.bf16.msra.mxu0 0
  %551 = vmatprep.subr.bf16.mxu0 0
  %552 = vmatpush1.bf16.msra.mxu0 %v219
  %553 = vmatprep.subr.bf16.mxu0 0
  %554 = vmatpush1.bf16.msra.mxu0 %v218
  %555 = vmatprep.subr.bf16.mxu0 0
  %556 = vmatpush2.bf16.msra.mxu0 0
  %557 = vmatprep.subr.bf16.mxu0 0
  %558 = vmatpush2.bf16.msra.mxu0 0
  %559 = vmatprep.subr.bf16.mxu0 0
  %560 = vmatpush2.bf16.msra.mxu0 0
  %561 = vmatprep.subr.bf16.mxu0 0
  %562 = vmatpush2.bf16.msra.mxu0 0
  %563 = vmatprep.subr.bf16.mxu0 0
  %564 = vmatpush2.bf16.msra.mxu0 0
  %565 = vmatprep.subr.bf16.mxu0 0
  %566 = vmatpush2.bf16.msra.mxu0 0
  %567 = vmatprep.subr.bf16.mxu0 0
  %568 = vmatpush2.bf16.msra.mxu0 0
  %569 = vmatprep.subr.bf16.mxu0 0
  %570 = vmatpush2.bf16.msra.mxu0 0
  %571 = vmatprep.mubr.bf16.mxu0 0
  %572 = vmatmul.mubr.bf16.gmra.mxu0 %v537
  %v573 = vpop.f32.mrf.mxu0
  %v574 = vadd.f32 %v29, %v573
  %v575 = vpop.f32.mrf.mxu0
  %v576 = vpop.f32.mrf.mxu0
  %v577 = vpop.f32.mrf.mxu0
  %578 = vdwg.mxu0
  %v579 = vadd.f32 %v192, %v574
  %v580 = vxor.u32 %v579, 2147483648
  %v581 = vmul.f32 %v580, 1.442695
  %v582 = vpow.pop %v581
  %v583 = vadd.f32 %v582, 1.0
  %v584 = vrcp.pop %v583
  %v585 = vmul.f32 1.0, %v584
  %587 = vrot.lane.b32.xlu0 %v574, 64
  %v588 = vpop.permute.xlu0 %587
  %v590 = vmul.f32 %v585, %v588
  %592 = vrot.lane.b32.xlu0 %v590, 64
  %v593 = vpop.permute.xlu0 %592
  %v595 = vadd.f32 %v192, %v593
  %v596 = vtanh.pop %v595
  %v597 = vsub.f32 1.0, %v585
  %599 = vrot.lane.b32.xlu0 %v596, 96
  %v600 = vpop.permute.xlu0 %599
  %v602 = vmul.f32 %v597, %v600
  %v603 = vmul.f32 %v585, %v526
  %v604 = vadd.f32 %v602, %v603
  %605 = vset.pattern.permute.xlu0 4
  %606 = vperm.xlu0 %605, %v18
  %v607 = vpop.permute.xlu0 %606
  %v609 = vmul.f32 %v604, %v607
  %v610 = vpack.c.bf16 %v604, %v604
  %612 = vrot.lane.b32.xlu0 %v610, 96
  %v613 = vpop.permute.xlu0 %612
  %v615 = vsel %vm222, %v613, 0
  %617 = vmatprep.subr.bf16.mxu0 0
  %618 = vmatpush1.bf16.msra.mxu0 0
  %619 = vmatprep.subr.bf16.mxu0 0
  %620 = vmatpush1.bf16.msra.mxu0 0
  %621 = vmatprep.subr.bf16.mxu0 0
  %622 = vmatpush1.bf16.msra.mxu0 0
  %623 = vmatprep.subr.bf16.mxu0 0
  %624 = vmatpush1.bf16.msra.mxu0 0
  %625 = vmatprep.subr.bf16.mxu0 0
  %626 = vmatpush1.bf16.msra.mxu0 0
  %627 = vmatprep.subr.bf16.mxu0 0
  %628 = vmatpush1.bf16.msra.mxu0 0
  %629 = vmatprep.subr.bf16.mxu0 0
  %630 = vmatpush1.bf16.msra.mxu0 %v219
  %631 = vmatprep.subr.bf16.mxu0 0
  %632 = vmatpush1.bf16.msra.mxu0 %v218
  %633 = vmatprep.subr.bf16.mxu0 0
  %634 = vmatpush2.bf16.msra.mxu0 0
  %635 = vmatprep.subr.bf16.mxu0 0
  %636 = vmatpush2.bf16.msra.mxu0 0
  %637 = vmatprep.subr.bf16.mxu0 0
  %638 = vmatpush2.bf16.msra.mxu0 0
  %639 = vmatprep.subr.bf16.mxu0 0
  %640 = vmatpush2.bf16.msra.mxu0 0
  %641 = vmatprep.subr.bf16.mxu0 0
  %642 = vmatpush2.bf16.msra.mxu0 0
  %643 = vmatprep.subr.bf16.mxu0 0
  %644 = vmatpush2.bf16.msra.mxu0 0
  %645 = vmatprep.subr.bf16.mxu0 0
  %646 = vmatpush2.bf16.msra.mxu0 0
  %647 = vmatprep.subr.bf16.mxu0 0
  %648 = vmatpush2.bf16.msra.mxu0 0
  %649 = vmatprep.mubr.bf16.mxu0 0
  %650 = vmatmul.mubr.bf16.gmra.mxu0 %v615
  %v651 = vpop.f32.mrf.mxu0
  %v652 = vadd.f32 %v29, %v651
  %v653 = vpop.f32.mrf.mxu0
  %v654 = vpop.f32.mrf.mxu0
  %v655 = vpop.f32.mrf.mxu0
  %656 = vdwg.mxu0
  %v657 = vadd.f32 %v197, %v652
  %v658 = vxor.u32 %v657, 2147483648
  %v659 = vmul.f32 %v658, 1.442695
  %v660 = vpow.pop %v659
  %v661 = vadd.f32 %v660, 1.0
  %v662 = vrcp.pop %v661
  %v663 = vmul.f32 1.0, %v662
  %665 = vrot.lane.b32.xlu0 %v652, 64
  %v666 = vpop.permute.xlu0 %665
  %v668 = vmul.f32 %v663, %v666
  %670 = vrot.lane.b32.xlu0 %v668, 64
  %v671 = vpop.permute.xlu0 %670
  %v673 = vadd.f32 %v197, %v671
  %v674 = vtanh.pop %v673
  %v675 = vsub.f32 1.0, %v663
  %677 = vrot.lane.b32.xlu0 %v674, 96
  %v678 = vpop.permute.xlu0 %677
  %v680 = vmul.f32 %v675, %v678
  %v681 = vmul.f32 %v663, %v604
  %v682 = vadd.f32 %v680, %v681
  %683 = vset.pattern.permute.xlu0 5
  %684 = vperm.xlu0 %683, %v18
  %v685 = vpop.permute.xlu0 %684
  %v687 = vmul.f32 %v682, %v685
  %v688 = vpack.c.bf16 %v682, %v682
  %690 = vrot.lane.b32.xlu0 %v688, 96
  %v691 = vpop.permute.xlu0 %690
  %v693 = vsel %vm222, %v691, 0
  %695 = vmatprep.subr.bf16.mxu0 0
  %696 = vmatpush1.bf16.msra.mxu0 0
  %697 = vmatprep.subr.bf16.mxu0 0
  %698 = vmatpush1.bf16.msra.mxu0 0
  %699 = vmatprep.subr.bf16.mxu0 0
  %700 = vmatpush1.bf16.msra.mxu0 0
  %701 = vmatprep.subr.bf16.mxu0 0
  %702 = vmatpush1.bf16.msra.mxu0 0
  %703 = vmatprep.subr.bf16.mxu0 0
  %704 = vmatpush1.bf16.msra.mxu0 0
  %705 = vmatprep.subr.bf16.mxu0 0
  %706 = vmatpush1.bf16.msra.mxu0 0
  %707 = vmatprep.subr.bf16.mxu0 0
  %708 = vmatpush1.bf16.msra.mxu0 %v219
  %709 = vmatprep.subr.bf16.mxu0 0
  %710 = vmatpush1.bf16.msra.mxu0 %v218
  %711 = vmatprep.subr.bf16.mxu0 0
  %712 = vmatpush2.bf16.msra.mxu0 0
  %713 = vmatprep.subr.bf16.mxu0 0
  %714 = vmatpush2.bf16.msra.mxu0 0
  %715 = vmatprep.subr.bf16.mxu0 0
  %716 = vmatpush2.bf16.msra.mxu0 0
  %717 = vmatprep.subr.bf16.mxu0 0
  %718 = vmatpush2.bf16.msra.mxu0 0
  %719 = vmatprep.subr.bf16.mxu0 0
  %720 = vmatpush2.bf16.msra.mxu0 0
  %721 = vmatprep.subr.bf16.mxu0 0
  %722 = vmatpush2.bf16.msra.mxu0 0
  %723 = vmatprep.subr.bf16.mxu0 0
  %724 = vmatpush2.bf16.msra.mxu0 0
  %725 = vmatprep.subr.bf16.mxu0 0
  %726 = vmatpush2.bf16.msra.mxu0 0
  %727 = vmatprep.mubr.bf16.mxu0 0
  %728 = vmatmul.mubr.bf16.gmra.mxu0 %v693
  %v729 = vpop.f32.mrf.mxu0
  %v730 = vadd.f32 %v29, %v729
  %v731 = vpop.f32.mrf.mxu0
  %v732 = vpop.f32.mrf.mxu0
  %v733 = vpop.f32.mrf.mxu0
  %734 = vdwg.mxu0
  %v735 = vadd.f32 %v202, %v730
  %v736 = vxor.u32 %v735, 2147483648
  %v737 = vmul.f32 %v736, 1.442695
  %v738 = vpow.pop %v737
  %v739 = vadd.f32 %v738, 1.0
  %v740 = vrcp.pop %v739
  %v741 = vmul.f32 1.0, %v740
  %743 = vrot.lane.b32.xlu0 %v730, 64
  %v744 = vpop.permute.xlu0 %743
  %v746 = vmul.f32 %v741, %v744
  %748 = vrot.lane.b32.xlu0 %v746, 64
  %v749 = vpop.permute.xlu0 %748
  %v751 = vadd.f32 %v202, %v749
  %v752 = vtanh.pop %v751
  %v753 = vsub.f32 1.0, %v741
  %755 = vrot.lane.b32.xlu0 %v752, 96
  %v756 = vpop.permute.xlu0 %755
  %v758 = vmul.f32 %v753, %v756
  %v759 = vmul.f32 %v741, %v682
  %v760 = vadd.f32 %v758, %v759
  %761 = vset.pattern.permute.xlu0 6
  %762 = vperm.xlu0 %761, %v18
  %v763 = vpop.permute.xlu0 %762
  %v765 = vmul.f32 %v760, %v763
  %v766 = vpack.c.bf16 %v760, %v760
  %768 = vrot.lane.b32.xlu0 %v766, 96
  %v769 = vpop.permute.xlu0 %768
  %v771 = vsel %vm222, %v769, 0
  %773 = vmatprep.subr.bf16.mxu0 0
  %774 = vmatpush1.bf16.msra.mxu0 0
  %775 = vmatprep.subr.bf16.mxu0 0
  %776 = vmatpush1.bf16.msra.mxu0 0
  %777 = vmatprep.subr.bf16.mxu0 0
  %778 = vmatpush1.bf16.msra.mxu0 0
  %779 = vmatprep.subr.bf16.mxu0 0
  %780 = vmatpush1.bf16.msra.mxu0 0
  %781 = vmatprep.subr.bf16.mxu0 0
  %782 = vmatpush1.bf16.msra.mxu0 0
  %783 = vmatprep.subr.bf16.mxu0 0
  %784 = vmatpush1.bf16.msra.mxu0 0
  %785 = vmatprep.subr.bf16.mxu0 0
  %786 = vmatpush1.bf16.msra.mxu0 %v219
  %787 = vmatprep.subr.bf16.mxu0 0
  %788 = vmatpush1.bf16.msra.mxu0 %v218
  %789 = vmatprep.subr.bf16.mxu0 0
  %790 = vmatpush2.bf16.msra.mxu0 0
  %791 = vmatprep.subr.bf16.mxu0 0
  %792 = vmatpush2.bf16.msra.mxu0 0
  %793 = vmatprep.subr.bf16.mxu0 0
  %794 = vmatpush2.bf16.msra.mxu0 0
  %795 = vmatprep.subr.bf16.mxu0 0
  %796 = vmatpush2.bf16.msra.mxu0 0
  %797 = vmatprep.subr.bf16.mxu0 0
  %798 = vmatpush2.bf16.msra.mxu0 0
  %799 = vmatprep.subr.bf16.mxu0 0
  %800 = vmatpush2.bf16.msra.mxu0 0
  %801 = vmatprep.subr.bf16.mxu0 0
  %802 = vmatpush2.bf16.msra.mxu0 0
  %803 = vmatprep.subr.bf16.mxu0 0
  %804 = vmatpush2.bf16.msra.mxu0 0
  %805 = vmatprep.mubr.bf16.mxu0 0
  %806 = vmatmul.mubr.bf16.gmra.mxu0 %v771
  %v807 = vpop.f32.mrf.mxu0
  %v808 = vadd.f32 %v29, %v807
  %v809 = vpop.f32.mrf.mxu0
  %v810 = vpop.f32.mrf.mxu0
  %v811 = vpop.f32.mrf.mxu0
  %812 = vdwg.mxu0
  %v813 = vadd.f32 %v207, %v808
  %v814 = vxor.u32 %v813, 2147483648
  %v815 = vmul.f32 %v814, 1.442695
  %v816 = vpow.pop %v815
  %v817 = vadd.f32 %v816, 1.0
  %v818 = vrcp.pop %v817
  %v819 = vmul.f32 1.0, %v818
  %821 = vrot.lane.b32.xlu0 %v808, 64
  %v822 = vpop.permute.xlu0 %821
  %v824 = vmul.f32 %v819, %v822
  %826 = vrot.lane.b32.xlu0 %v824, 64
  %v827 = vpop.permute.xlu0 %826
  %v829 = vadd.f32 %v207, %v827
  %v830 = vtanh.pop %v829
  %v831 = vsub.f32 1.0, %v819
  %833 = vrot.lane.b32.xlu0 %v830, 96
  %v834 = vpop.permute.xlu0 %833
  %v836 = vmul.f32 %v831, %v834
  %v837 = vmul.f32 %v819, %v760
  %v838 = vadd.f32 %v836, %v837
  %839 = vset.pattern.permute.xlu0 7
  %840 = vperm.xlu0 %839, %v18
  %v841 = vpop.permute.xlu0 %840
  %v843 = vmul.f32 %v838, %v841
  %852 = vrot.lane.b32.xlu0 %v297, 96
  %v853 = vpop.permute.xlu0 %852
  %854 = vrot.lane.b32.xlu0 %v375, 96
  %v855 = vpop.permute.xlu0 %854
  %856 = vrot.lane.b32.xlu0 %v453, 96
  %v857 = vpop.permute.xlu0 %856
  %858 = vrot.lane.b32.xlu0 %v531, 96
  %v859 = vpop.permute.xlu0 %858
  %860 = vrot.lane.b32.xlu0 %v609, 96
  %v861 = vpop.permute.xlu0 %860
  %862 = vrot.lane.b32.xlu0 %v687, 96
  %v863 = vpop.permute.xlu0 %862
  %864 = vrot.lane.b32.xlu0 %v765, 96
  %v865 = vpop.permute.xlu0 %864
  %866 = vrot.lane.b32.xlu0 %v843, 96
  %v867 = vpop.permute.xlu0 %866
  %v868 = vsel %vm222, %v853, 0
  %v870 = vsel %vm222, %v855, 0
  %v872 = vsel %vm222, %v857, 0
  %v874 = vsel %vm222, %v859, 0
  %v876 = vsel %vm222, %v861, 0
  %v878 = vsel %vm222, %v863, 0
  %v880 = vsel %vm222, %v865, 0
  %v882 = vsel %vm222, %v867, 0
  %884 = vmatprep.subr.mxu0 0.0
  %885 = vmatpush1.msra.mxu0 0.0
  %886 = vmatprep.subr.mxu0 0.0
  %887 = vmatpush1.msra.mxu0 0.0
  %888 = vmatprep.subr.mxu0 0.0
  %889 = vmatpush1.msra.mxu0 0.0
  %890 = vmatprep.subr.mxu0 0.0
  %891 = vmatpush1.msra.mxu0 0.0
  %892 = vmatprep.subr.mxu0 0.0
  %893 = vmatpush1.msra.mxu0 0.0
  %894 = vmatprep.subr.mxu0 0.0
  %895 = vmatpush1.msra.mxu0 0.0
  %896 = vmatprep.subr.mxu0 0.0
  %897 = vmatpush1.msra.mxu0 0.0
  %898 = vmatprep.subr.mxu0 0.0
  %899 = vmatpush1.msra.mxu0 0.0
  %900 = vmatprep.subr.mxu0 0.0
  %901 = vmatpush1.msra.mxu0 0.0
  %902 = vmatprep.subr.mxu0 0.0
  %903 = vmatpush1.msra.mxu0 0.0
  %904 = vmatprep.subr.mxu0 0.0
  %905 = vmatpush1.msra.mxu0 0.0
  %906 = vmatprep.subr.mxu0 0.0
  %907 = vmatpush1.msra.mxu0 0.0
  %908 = vmatprep.subr.mxu0 0.0
  %909 = vmatpush1.msra.mxu0 %v23
  %910 = vmatprep.subr.mxu0 0.0
  %911 = vmatpush1.msra.mxu0 %v22
  %912 = vmatprep.subr.mxu0 0.0
  %913 = vmatpush1.msra.mxu0 %v21
  %914 = vmatprep.subr.mxu0 0.0
  %915 = vmatpush1.msra.mxu0 %v20
  %916 = vmatprep.subr.mxu0 0.0
  %917 = vmatpush2.msra.mxu0 0.0
  %918 = vmatprep.subr.mxu0 0.0
  %919 = vmatpush2.msra.mxu0 0.0
  %920 = vmatprep.subr.mxu0 0.0
  %921 = vmatpush2.msra.mxu0 0.0
  %922 = vmatprep.subr.mxu0 0.0
  %923 = vmatpush2.msra.mxu0 0.0
  %924 = vmatprep.subr.mxu0 0.0
  %925 = vmatpush2.msra.mxu0 0.0
  %926 = vmatprep.subr.mxu0 0.0
  %927 = vmatpush2.msra.mxu0 0.0
  %928 = vmatprep.subr.mxu0 0.0
  %929 = vmatpush2.msra.mxu0 0.0
  %930 = vmatprep.subr.mxu0 0.0
  %931 = vmatpush2.msra.mxu0 0.0
  %932 = vmatprep.subr.mxu0 0.0
  %933 = vmatpush2.msra.mxu0 0.0
  %934 = vmatprep.subr.mxu0 0.0
  %935 = vmatpush2.msra.mxu0 0.0
  %936 = vmatprep.subr.mxu0 0.0
  %937 = vmatpush2.msra.mxu0 0.0
  %938 = vmatprep.subr.mxu0 0.0
  %939 = vmatpush2.msra.mxu0 0.0
  %940 = vmatprep.subr.mxu0 0.0
  %941 = vmatpush2.msra.mxu0 0.0
  %942 = vmatprep.subr.mxu0 0.0
  %943 = vmatpush2.msra.mxu0 0.0
  %944 = vmatprep.subr.mxu0 0.0
  %945 = vmatpush2.msra.mxu0 0.0
  %946 = vmatprep.subr.mxu0 0.0
  %947 = vmatpush2.msra.mxu0 0.0
  %948 = vmatprep.mubr.f32.mxu0 0.0
  %949 = vmatmul.mubr.f32.gmra.mxu0 %v868
  %v950 = vpop.f32.mrf.mxu0
  %v951 = vadd.f32 0.0, %v950
  %v952 = vpop.f32.mrf.mxu0
  %953 = vmatprep.mubr.f32.mxu0 0.0
  %954 = vmatmul.mubr.f32.gmra.mxu0 %v870
  %v955 = vpop.f32.mrf.mxu0
  %v956 = vadd.f32 0.0, %v955
  %v957 = vpop.f32.mrf.mxu0
  %958 = vmatprep.mubr.f32.mxu0 0.0
  %959 = vmatmul.mubr.f32.gmra.mxu0 %v872
  %v960 = vpop.f32.mrf.mxu0
  %v961 = vadd.f32 0.0, %v960
  %v962 = vpop.f32.mrf.mxu0
  %963 = vmatprep.mubr.f32.mxu0 0.0
  %964 = vmatmul.mubr.f32.gmra.mxu0 %v874
  %v965 = vpop.f32.mrf.mxu0
  %v966 = vadd.f32 0.0, %v965
  %v967 = vpop.f32.mrf.mxu0
  %968 = vmatprep.mubr.f32.mxu0 0.0
  %969 = vmatmul.mubr.f32.gmra.mxu0 %v876
  %v970 = vpop.f32.mrf.mxu0
  %v971 = vadd.f32 0.0, %v970
  %v972 = vpop.f32.mrf.mxu0
  %973 = vmatprep.mubr.f32.mxu0 0.0
  %974 = vmatmul.mubr.f32.gmra.mxu0 %v878
  %v975 = vpop.f32.mrf.mxu0
  %v976 = vadd.f32 0.0, %v975
  %v977 = vpop.f32.mrf.mxu0
  %978 = vmatprep.mubr.f32.mxu0 0.0
  %979 = vmatmul.mubr.f32.gmra.mxu0 %v880
  %v980 = vpop.f32.mrf.mxu0
  %v981 = vadd.f32 0.0, %v980
  %v982 = vpop.f32.mrf.mxu0
  %983 = vmatprep.mubr.f32.mxu0 0.0
  %984 = vmatmul.mubr.f32.gmra.mxu0 %v882
  %v985 = vpop.f32.mrf.mxu0
  %v986 = vadd.f32 0.0, %v985
  %v987 = vpop.f32.mrf.mxu0
  %988 = vdwg.mxu0
  %v993 = vunpack.c.l.b16 %v64
  %v994 = vunpack.c.h.b16 %v64
  %v995 = vunpack.c.l.b16 %v65
  %v996 = vunpack.c.h.b16 %v65
  %v997 = vunpack.c.l.b16 %v66
  %v998 = vunpack.c.h.b16 %v66
  %v999 = vunpack.c.l.b16 %v67
  %v1000 = vunpack.c.h.b16 %v67
  %v1001 = vpack.c.b16 %v995, %v993
  %v1002 = vpack.c.b16 %v996, %v994
  %v1003 = vpack.c.b16 %v999, %v997
  %v1004 = vpack.c.b16 %v1000, %v998
  %1009 = vmatprep.subr.bf16.mxu0 0
  %1010 = vmatpush1.bf16.msra.mxu0 0
  %1011 = vmatprep.subr.bf16.mxu0 0
  %1012 = vmatpush1.bf16.msra.mxu0 0
  %1013 = vmatprep.subr.bf16.mxu0 0
  %1014 = vmatpush1.bf16.msra.mxu0 0
  %1015 = vmatprep.subr.bf16.mxu0 0
  %1016 = vmatpush1.bf16.msra.mxu0 0
  %1017 = vmatprep.subr.bf16.mxu0 0
  %1018 = vmatpush1.bf16.msra.mxu0 0
  %1019 = vmatprep.subr.bf16.mxu0 0
  %1020 = vmatpush1.bf16.msra.mxu0 0
  %1021 = vmatprep.subr.bf16.mxu0 %v1004
  %1022 = vmatpush1.bf16.msra.mxu0 %v1003
  %1023 = vmatprep.subr.bf16.mxu0 %v1002
  %1024 = vmatpush1.bf16.msra.mxu0 %v1001
  %1025 = vmatprep.subr.bf16.mxu0 0
  %1026 = vmatpush2.bf16.msra.mxu0 0
  %1027 = vmatprep.subr.bf16.mxu0 0
  %1028 = vmatpush2.bf16.msra.mxu0 0
  %1029 = vmatprep.subr.bf16.mxu0 0
  %1030 = vmatpush2.bf16.msra.mxu0 0
  %1031 = vmatprep.subr.bf16.mxu0 0
  %1032 = vmatpush2.bf16.msra.mxu0 0
  %1033 = vmatprep.subr.bf16.mxu0 0
  %1034 = vmatpush2.bf16.msra.mxu0 0
  %1035 = vmatprep.subr.bf16.mxu0 0
  %1036 = vmatpush2.bf16.msra.mxu0 0
  %1037 = vmatprep.subr.bf16.mxu0 0
  %1038 = vmatpush2.bf16.msra.mxu0 0
  %1039 = vmatprep.subr.bf16.mxu0 0
  %1040 = vmatpush2.bf16.msra.mxu0 0
  %1041 = vmatprep.mubr.bf16.mxu0 0
  %1042 = vmatmul.mubr.bf16.gmra.mxu0 %v224
  %v1043 = vpop.f32.mrf.mxu0
  %v1044 = vadd.f32 0.0, %v1043
  %v1045 = vpop.f32.mrf.mxu0
  %v1046 = vadd.f32 0.0, %v1045
  %v1047 = vpop.f32.mrf.mxu0
  %v1048 = vpop.f32.mrf.mxu0
  %1049 = vdwg.mxu0
  %v1050 = vadd.f32 %v1044, %v34
  %v1051 = vadd.f32 %v1046, %v39
  %v1052 = vsel %vm80, %v1051, -inf
  %1053 = vmax.xlane.f32.xlu0 %v1052
  %v1054 = vpop.xlane.xlu0 %1053
  %v1055 = vsub.f32 %v1051, %v1054
  %v1056 = vmul.f32 %v1055, 1.442695
  %v1057 = vpow.pop %v1056
  %v1058 = vsel %vm80, %v1057, 0.0
  %1059 = vadd.xlane.f32.xlu0 %v1058
  %v1060 = vpop.xlane.xlu0 %1059
  %v1061 = vrcp.pop %v1060
  %v1062 = vmul.f32 %v1057, %v1061
  %1063 = vset.pattern.permute.xlu0 15
  %1064 = vperm.xlu0 %1063, %v18
  %v1065 = vpop.permute.xlu0 %1064
  %v1067 = vmul.f32 %v1065, %v49
  %v1068 = vadd.f32 %v44, %v1067
  %1070 = vset.pattern.permute.xlu0 0
  %1071 = vperm.xlu0 %1070, %v1062
  %v1072 = vpop.permute.xlu0 %1071
  %v1074 = vmul.f32 %v1072, %v951
  %v1075 = vadd.f32 %v1068, %v1074
  %1076 = vset.pattern.permute.xlu0 1
  %1077 = vperm.xlu0 %1076, %v1062
  %v1078 = vpop.permute.xlu0 %1077
  %v1080 = vmul.f32 %v1078, %v956
  %v1081 = vadd.f32 %v1075, %v1080
  %1082 = vset.pattern.permute.xlu0 2
  %1083 = vperm.xlu0 %1082, %v1062
  %v1084 = vpop.permute.xlu0 %1083
  %v1086 = vmul.f32 %v1084, %v961
  %v1087 = vadd.f32 %v1081, %v1086
  %1088 = vset.pattern.permute.xlu0 3
  %1089 = vperm.xlu0 %1088, %v1062
  %v1090 = vpop.permute.xlu0 %1089
  %v1092 = vmul.f32 %v1090, %v966
  %v1093 = vadd.f32 %v1087, %v1092
  %1094 = vset.pattern.permute.xlu0 4
  %1095 = vperm.xlu0 %1094, %v1062
  %v1096 = vpop.permute.xlu0 %1095
  %v1098 = vmul.f32 %v1096, %v971
  %v1099 = vadd.f32 %v1093, %v1098
  %1100 = vset.pattern.permute.xlu0 5
  %1101 = vperm.xlu0 %1100, %v1062
  %v1102 = vpop.permute.xlu0 %1101
  %v1104 = vmul.f32 %v1102, %v976
  %v1105 = vadd.f32 %v1099, %v1104
  %1106 = vset.pattern.permute.xlu0 6
  %1107 = vperm.xlu0 %1106, %v1062
  %v1108 = vpop.permute.xlu0 %1107
  %v1110 = vmul.f32 %v1108, %v981
  %v1111 = vadd.f32 %v1105, %v1110
  %1112 = vset.pattern.permute.xlu0 7
  %1113 = vperm.xlu0 %1112, %v1062
  %v1114 = vpop.permute.xlu0 %1113
  %v1116 = vmul.f32 %v1114, %v986
  %v1117 = vadd.f32 %v1111, %v1116
  %v1118 = vadd.f32 %v1117, %v1050
  %v1119 = vxor.u32 %v1118, 2147483648
  %v1120 = vmul.f32 %v1119, 1.442695
  %v1121 = vpow.pop %v1120
  %v1122 = vadd.f32 %v1121, 1.0
  %v1123 = vrcp.pop %v1122
  %v1124 = vmul.f32 1.0, %v1123
  %1126 = vrot.lane.b32.xlu0 %v1050, 64
  %v1127 = vpop.permute.xlu0 %1126
  %v1129 = vmul.f32 %v1124, %v1127
  %1131 = vrot.lane.b32.xlu0 %v1129, 64
  %v1132 = vpop.permute.xlu0 %1131
  %v1134 = vadd.f32 %v1117, %v1132
  %v1135 = vtanh.pop %v1134
  %v1136 = vsub.f32 1.0, %v1124
  %1138 = vrot.lane.b32.xlu0 %v1135, 96
  %v1139 = vpop.permute.xlu0 %1138
  %v1141 = vmul.f32 %v1136, %v1139
  %v1142 = vmul.f32 %v1124, 0.0
  %v1143 = vadd.f32 %v1141, %v1142
  %1145 = vrot.lane.b32.xlu0 %v54, 32
  %v1146 = vpop.permute.xlu0 %1145
  %v1148 = vmul.f32 %v1143, %v1146
  %1150 = vrot.lane.b32.xlu0 %v1148, 96
  %v1151 = vpop.permute.xlu0 %1150
  %v1153 = vsel %vm222, %v1151, 0.0
  %1154 = vadd.xlane.f32.xlu0 %v1153
  %v1155 = vpop.xlane.xlu0 %1154
  %v1156 = vadd.f32 %v1155, %v59
  %v1157 = vpack.c.bf16 %v1143, %v1143
  %1159 = vrot.lane.b32.xlu0 %v1157, 96
  %v1160 = vpop.permute.xlu0 %1159
  %v1162 = vsel %vm222, %v1160, 0
  %1164 = vmatprep.subr.bf16.mxu0 0
  %1165 = vmatpush1.bf16.msra.mxu0 0
  %1166 = vmatprep.subr.bf16.mxu0 0
  %1167 = vmatpush1.bf16.msra.mxu0 0
  %1168 = vmatprep.subr.bf16.mxu0 0
  %1169 = vmatpush1.bf16.msra.mxu0 0
  %1170 = vmatprep.subr.bf16.mxu0 0
  %1171 = vmatpush1.bf16.msra.mxu0 0
  %1172 = vmatprep.subr.bf16.mxu0 0
  %1173 = vmatpush1.bf16.msra.mxu0 0
  %1174 = vmatprep.subr.bf16.mxu0 0
  %1175 = vmatpush1.bf16.msra.mxu0 0
  %1176 = vmatprep.subr.bf16.mxu0 %v1004
  %1177 = vmatpush1.bf16.msra.mxu0 %v1003
  %1178 = vmatprep.subr.bf16.mxu0 %v1002
  %1179 = vmatpush1.bf16.msra.mxu0 %v1001
  %1180 = vmatprep.subr.bf16.mxu0 0
  %1181 = vmatpush2.bf16.msra.mxu0 0
  %1182 = vmatprep.subr.bf16.mxu0 0
  %1183 = vmatpush2.bf16.msra.mxu0 0
  %1184 = vmatprep.subr.bf16.mxu0 0
  %1185 = vmatpush2.bf16.msra.mxu0 0
  %1186 = vmatprep.subr.bf16.mxu0 0
  %1187 = vmatpush2.bf16.msra.mxu0 0
  %1188 = vmatprep.subr.bf16.mxu0 0
  %1189 = vmatpush2.bf16.msra.mxu0 0
  %1190 = vmatprep.subr.bf16.mxu0 0
  %1191 = vmatpush2.bf16.msra.mxu0 0
  %1192 = vmatprep.subr.bf16.mxu0 0
  %1193 = vmatpush2.bf16.msra.mxu0 0
  %1194 = vmatprep.subr.bf16.mxu0 0
  %1195 = vmatpush2.bf16.msra.mxu0 0
  %1196 = vmatprep.mubr.bf16.mxu0 0
  %1197 = vmatmul.mubr.bf16.gmra.mxu0 %v1162
  %v1198 = vpop.f32.mrf.mxu0
  %v1199 = vadd.f32 0.0, %v1198
  %v1200 = vpop.f32.mrf.mxu0
  %v1201 = vadd.f32 0.0, %v1200
  %v1202 = vpop.f32.mrf.mxu0
  %v1203 = vpop.f32.mrf.mxu0
  %1204 = vdwg.mxu0
  %v1205 = vadd.f32 %v1199, %v34
  %v1206 = vadd.f32 %v1201, %v39
  %v1207 = vsel %vm80, %v1206, -inf
  %1208 = vmax.xlane.f32.xlu0 %v1207
  %v1209 = vpop.xlane.xlu0 %1208
  %v1210 = vsub.f32 %v1206, %v1209
  %v1211 = vmul.f32 %v1210, 1.442695
  %v1212 = vpow.pop %v1211
  %v1213 = vsel %vm80, %v1212, 0.0
  %1214 = vadd.xlane.f32.xlu0 %v1213
  %v1215 = vpop.xlane.xlu0 %1214
  %v1216 = vrcp.pop %v1215
  %v1217 = vmul.f32 %v1212, %v1216
  %1219 = vset.pattern.permute.xlu0 0
  %1220 = vperm.xlu0 %1219, %v1156
  %v1221 = vpop.permute.xlu0 %1220
  %v1223 = vmul.f32 %v1221, %v49
  %v1224 = vadd.f32 %v44, %v1223
  %1226 = vset.pattern.permute.xlu0 0
  %1227 = vperm.xlu0 %1226, %v1217
  %v1228 = vpop.permute.xlu0 %1227
  %v1230 = vmul.f32 %v1228, %v951
  %v1231 = vadd.f32 %v1224, %v1230
  %1232 = vset.pattern.permute.xlu0 1
  %1233 = vperm.xlu0 %1232, %v1217
  %v1234 = vpop.permute.xlu0 %1233
  %v1236 = vmul.f32 %v1234, %v956
  %v1237 = vadd.f32 %v1231, %v1236
  %1238 = vset.pattern.permute.xlu0 2
  %1239 = vperm.xlu0 %1238, %v1217
  %v1240 = vpop.permute.xlu0 %1239
  %v1242 = vmul.f32 %v1240, %v961
  %v1243 = vadd.f32 %v1237, %v1242
  %1244 = vset.pattern.permute.xlu0 3
  %1245 = vperm.xlu0 %1244, %v1217
  %v1246 = vpop.permute.xlu0 %1245
  %v1248 = vmul.f32 %v1246, %v966
  %v1249 = vadd.f32 %v1243, %v1248
  %1250 = vset.pattern.permute.xlu0 4
  %1251 = vperm.xlu0 %1250, %v1217
  %v1252 = vpop.permute.xlu0 %1251
  %v1254 = vmul.f32 %v1252, %v971
  %v1255 = vadd.f32 %v1249, %v1254
  %1256 = vset.pattern.permute.xlu0 5
  %1257 = vperm.xlu0 %1256, %v1217
  %v1258 = vpop.permute.xlu0 %1257
  %v1260 = vmul.f32 %v1258, %v976
  %v1261 = vadd.f32 %v1255, %v1260
  %1262 = vset.pattern.permute.xlu0 6
  %1263 = vperm.xlu0 %1262, %v1217
  %v1264 = vpop.permute.xlu0 %1263
  %v1266 = vmul.f32 %v1264, %v981
  %v1267 = vadd.f32 %v1261, %v1266
  %1268 = vset.pattern.permute.xlu0 7
  %1269 = vperm.xlu0 %1268, %v1217
  %v1270 = vpop.permute.xlu0 %1269
  %v1272 = vmul.f32 %v1270, %v986
  %v1273 = vadd.f32 %v1267, %v1272
  %v1274 = vadd.f32 %v1273, %v1205
  %v1275 = vxor.u32 %v1274, 2147483648
  %v1276 = vmul.f32 %v1275, 1.442695
  %v1277 = vpow.pop %v1276
  %v1278 = vadd.f32 %v1277, 1.0
  %v1279 = vrcp.pop %v1278
  %v1280 = vmul.f32 1.0, %v1279
  %1282 = vrot.lane.b32.xlu0 %v1205, 64
  %v1283 = vpop.permute.xlu0 %1282
  %v1285 = vmul.f32 %v1280, %v1283
  %1287 = vrot.lane.b32.xlu0 %v1285, 64
  %v1288 = vpop.permute.xlu0 %1287
  %v1290 = vadd.f32 %v1273, %v1288
  %v1291 = vtanh.pop %v1290
  %v1292 = vsub.f32 1.0, %v1280
  %1294 = vrot.lane.b32.xlu0 %v1291, 96
  %v1295 = vpop.permute.xlu0 %1294
  %v1297 = vmul.f32 %v1292, %v1295
  %v1298 = vmul.f32 %v1280, %v1143
  %v1299 = vadd.f32 %v1297, %v1298
  %v1300 = vmul.f32 %v1299, %v1146
  %1302 = vrot.lane.b32.xlu0 %v1300, 96
  %v1303 = vpop.permute.xlu0 %1302
  %v1305 = vsel %vm222, %v1303, 0.0
  %1306 = vadd.xlane.f32.xlu0 %v1305
  %v1307 = vpop.xlane.xlu0 %1306
  %v1308 = vadd.f32 %v1307, %v59
  %v1309 = vpack.c.bf16 %v1299, %v1299
  %1311 = vrot.lane.b32.xlu0 %v1309, 96
  %v1312 = vpop.permute.xlu0 %1311
  %v1314 = vsel %vm222, %v1312, 0
  %1316 = vmatprep.subr.bf16.mxu0 0
  %1317 = vmatpush1.bf16.msra.mxu0 0
  %1318 = vmatprep.subr.bf16.mxu0 0
  %1319 = vmatpush1.bf16.msra.mxu0 0
  %1320 = vmatprep.subr.bf16.mxu0 0
  %1321 = vmatpush1.bf16.msra.mxu0 0
  %1322 = vmatprep.subr.bf16.mxu0 0
  %1323 = vmatpush1.bf16.msra.mxu0 0
  %1324 = vmatprep.subr.bf16.mxu0 0
  %1325 = vmatpush1.bf16.msra.mxu0 0
  %1326 = vmatprep.subr.bf16.mxu0 0
  %1327 = vmatpush1.bf16.msra.mxu0 0
  %1328 = vmatprep.subr.bf16.mxu0 %v1004
  %1329 = vmatpush1.bf16.msra.mxu0 %v1003
  %1330 = vmatprep.subr.bf16.mxu0 %v1002
  %1331 = vmatpush1.bf16.msra.mxu0 %v1001
  %1332 = vmatprep.subr.bf16.mxu0 0
  %1333 = vmatpush2.bf16.msra.mxu0 0
  %1334 = vmatprep.subr.bf16.mxu0 0
  %1335 = vmatpush2.bf16.msra.mxu0 0
  %1336 = vmatprep.subr.bf16.mxu0 0
  %1337 = vmatpush2.bf16.msra.mxu0 0
  %1338 = vmatprep.subr.bf16.mxu0 0
  %1339 = vmatpush2.bf16.msra.mxu0 0
  %1340 = vmatprep.subr.bf16.mxu0 0
  %1341 = vmatpush2.bf16.msra.mxu0 0
  %1342 = vmatprep.subr.bf16.mxu0 0
  %1343 = vmatpush2.bf16.msra.mxu0 0
  %1344 = vmatprep.subr.bf16.mxu0 0
  %1345 = vmatpush2.bf16.msra.mxu0 0
  %1346 = vmatprep.subr.bf16.mxu0 0
  %1347 = vmatpush2.bf16.msra.mxu0 0
  %1348 = vmatprep.mubr.bf16.mxu0 0
  %1349 = vmatmul.mubr.bf16.gmra.mxu0 %v1314
  %v1350 = vpop.f32.mrf.mxu0
  %v1351 = vadd.f32 0.0, %v1350
  %v1352 = vpop.f32.mrf.mxu0
  %v1353 = vadd.f32 0.0, %v1352
  %v1354 = vpop.f32.mrf.mxu0
  %v1355 = vpop.f32.mrf.mxu0
  %1356 = vdwg.mxu0
  %v1357 = vadd.f32 %v1351, %v34
  %v1358 = vadd.f32 %v1353, %v39
  %v1359 = vsel %vm80, %v1358, -inf
  %1360 = vmax.xlane.f32.xlu0 %v1359
  %v1361 = vpop.xlane.xlu0 %1360
  %v1362 = vsub.f32 %v1358, %v1361
  %v1363 = vmul.f32 %v1362, 1.442695
  %v1364 = vpow.pop %v1363
  %v1365 = vsel %vm80, %v1364, 0.0
  %1366 = vadd.xlane.f32.xlu0 %v1365
  %v1367 = vpop.xlane.xlu0 %1366
  %v1368 = vrcp.pop %v1367
  %v1369 = vmul.f32 %v1364, %v1368
  %1371 = vset.pattern.permute.xlu0 0
  %1372 = vperm.xlu0 %1371, %v1308
  %v1373 = vpop.permute.xlu0 %1372
  %v1375 = vmul.f32 %v1373, %v49
  %v1376 = vadd.f32 %v44, %v1375
  %1378 = vset.pattern.permute.xlu0 0
  %1379 = vperm.xlu0 %1378, %v1369
  %v1380 = vpop.permute.xlu0 %1379
  %v1382 = vmul.f32 %v1380, %v951
  %v1383 = vadd.f32 %v1376, %v1382
  %1384 = vset.pattern.permute.xlu0 1
  %1385 = vperm.xlu0 %1384, %v1369
  %v1386 = vpop.permute.xlu0 %1385
  %v1388 = vmul.f32 %v1386, %v956
  %v1389 = vadd.f32 %v1383, %v1388
  %1390 = vset.pattern.permute.xlu0 2
  %1391 = vperm.xlu0 %1390, %v1369
  %v1392 = vpop.permute.xlu0 %1391
  %v1394 = vmul.f32 %v1392, %v961
  %v1395 = vadd.f32 %v1389, %v1394
  %1396 = vset.pattern.permute.xlu0 3
  %1397 = vperm.xlu0 %1396, %v1369
  %v1398 = vpop.permute.xlu0 %1397
  %v1400 = vmul.f32 %v1398, %v966
  %v1401 = vadd.f32 %v1395, %v1400
  %1402 = vset.pattern.permute.xlu0 4
  %1403 = vperm.xlu0 %1402, %v1369
  %v1404 = vpop.permute.xlu0 %1403
  %v1406 = vmul.f32 %v1404, %v971
  %v1407 = vadd.f32 %v1401, %v1406
  %1408 = vset.pattern.permute.xlu0 5
  %1409 = vperm.xlu0 %1408, %v1369
  %v1410 = vpop.permute.xlu0 %1409
  %v1412 = vmul.f32 %v1410, %v976
  %v1413 = vadd.f32 %v1407, %v1412
  %1414 = vset.pattern.permute.xlu0 6
  %1415 = vperm.xlu0 %1414, %v1369
  %v1416 = vpop.permute.xlu0 %1415
  %v1418 = vmul.f32 %v1416, %v981
  %v1419 = vadd.f32 %v1413, %v1418
  %1420 = vset.pattern.permute.xlu0 7
  %1421 = vperm.xlu0 %1420, %v1369
  %v1422 = vpop.permute.xlu0 %1421
  %v1424 = vmul.f32 %v1422, %v986
  %v1425 = vadd.f32 %v1419, %v1424
  %v1426 = vadd.f32 %v1425, %v1357
  %v1427 = vxor.u32 %v1426, 2147483648
  %v1428 = vmul.f32 %v1427, 1.442695
  %v1429 = vpow.pop %v1428
  %v1430 = vadd.f32 %v1429, 1.0
  %v1431 = vrcp.pop %v1430
  %v1432 = vmul.f32 1.0, %v1431
  %1434 = vrot.lane.b32.xlu0 %v1357, 64
  %v1435 = vpop.permute.xlu0 %1434
  %v1437 = vmul.f32 %v1432, %v1435
  %1439 = vrot.lane.b32.xlu0 %v1437, 64
  %v1440 = vpop.permute.xlu0 %1439
  %v1442 = vadd.f32 %v1425, %v1440
  %v1443 = vtanh.pop %v1442
  %v1444 = vsub.f32 1.0, %v1432
  %1446 = vrot.lane.b32.xlu0 %v1443, 96
  %v1447 = vpop.permute.xlu0 %1446
  %v1449 = vmul.f32 %v1444, %v1447
  %v1450 = vmul.f32 %v1432, %v1299
  %v1451 = vadd.f32 %v1449, %v1450
  %v1452 = vmul.f32 %v1451, %v1146
  %1454 = vrot.lane.b32.xlu0 %v1452, 96
  %v1455 = vpop.permute.xlu0 %1454
  %v1457 = vsel %vm222, %v1455, 0.0
  %1458 = vadd.xlane.f32.xlu0 %v1457
  %v1459 = vpop.xlane.xlu0 %1458
  %v1460 = vadd.f32 %v1459, %v59
  %v1461 = vpack.c.bf16 %v1451, %v1451
  %1463 = vrot.lane.b32.xlu0 %v1461, 96
  %v1464 = vpop.permute.xlu0 %1463
  %v1466 = vsel %vm222, %v1464, 0
  %1468 = vmatprep.subr.bf16.mxu0 0
  %1469 = vmatpush1.bf16.msra.mxu0 0
  %1470 = vmatprep.subr.bf16.mxu0 0
  %1471 = vmatpush1.bf16.msra.mxu0 0
  %1472 = vmatprep.subr.bf16.mxu0 0
  %1473 = vmatpush1.bf16.msra.mxu0 0
  %1474 = vmatprep.subr.bf16.mxu0 0
  %1475 = vmatpush1.bf16.msra.mxu0 0
  %1476 = vmatprep.subr.bf16.mxu0 0
  %1477 = vmatpush1.bf16.msra.mxu0 0
  %1478 = vmatprep.subr.bf16.mxu0 0
  %1479 = vmatpush1.bf16.msra.mxu0 0
  %1480 = vmatprep.subr.bf16.mxu0 %v1004
  %1481 = vmatpush1.bf16.msra.mxu0 %v1003
  %1482 = vmatprep.subr.bf16.mxu0 %v1002
  %1483 = vmatpush1.bf16.msra.mxu0 %v1001
  %1484 = vmatprep.subr.bf16.mxu0 0
  %1485 = vmatpush2.bf16.msra.mxu0 0
  %1486 = vmatprep.subr.bf16.mxu0 0
  %1487 = vmatpush2.bf16.msra.mxu0 0
  %1488 = vmatprep.subr.bf16.mxu0 0
  %1489 = vmatpush2.bf16.msra.mxu0 0
  %1490 = vmatprep.subr.bf16.mxu0 0
  %1491 = vmatpush2.bf16.msra.mxu0 0
  %1492 = vmatprep.subr.bf16.mxu0 0
  %1493 = vmatpush2.bf16.msra.mxu0 0
  %1494 = vmatprep.subr.bf16.mxu0 0
  %1495 = vmatpush2.bf16.msra.mxu0 0
  %1496 = vmatprep.subr.bf16.mxu0 0
  %1497 = vmatpush2.bf16.msra.mxu0 0
  %1498 = vmatprep.subr.bf16.mxu0 0
  %1499 = vmatpush2.bf16.msra.mxu0 0
  %1500 = vmatprep.mubr.bf16.mxu0 0
  %1501 = vmatmul.mubr.bf16.gmra.mxu0 %v1466
  %v1502 = vpop.f32.mrf.mxu0
  %v1503 = vadd.f32 0.0, %v1502
  %v1504 = vpop.f32.mrf.mxu0
  %v1505 = vadd.f32 0.0, %v1504
  %v1506 = vpop.f32.mrf.mxu0
  %v1507 = vpop.f32.mrf.mxu0
  %1508 = vdwg.mxu0
  %v1509 = vadd.f32 %v1503, %v34
  %v1510 = vadd.f32 %v1505, %v39
  %v1511 = vsel %vm80, %v1510, -inf
  %1512 = vmax.xlane.f32.xlu0 %v1511
  %v1513 = vpop.xlane.xlu0 %1512
  %v1514 = vsub.f32 %v1510, %v1513
  %v1515 = vmul.f32 %v1514, 1.442695
  %v1516 = vpow.pop %v1515
  %v1517 = vsel %vm80, %v1516, 0.0
  %1518 = vadd.xlane.f32.xlu0 %v1517
  %v1519 = vpop.xlane.xlu0 %1518
  %v1520 = vrcp.pop %v1519
  %v1521 = vmul.f32 %v1516, %v1520
  %1523 = vset.pattern.permute.xlu0 0
  %1524 = vperm.xlu0 %1523, %v1460
  %v1525 = vpop.permute.xlu0 %1524
  %v1527 = vmul.f32 %v1525, %v49
  %v1528 = vadd.f32 %v44, %v1527
  %1530 = vset.pattern.permute.xlu0 0
  %1531 = vperm.xlu0 %1530, %v1521
  %v1532 = vpop.permute.xlu0 %1531
  %v1534 = vmul.f32 %v1532, %v951
  %v1535 = vadd.f32 %v1528, %v1534
  %1536 = vset.pattern.permute.xlu0 1
  %1537 = vperm.xlu0 %1536, %v1521
  %v1538 = vpop.permute.xlu0 %1537
  %v1540 = vmul.f32 %v1538, %v956
  %v1541 = vadd.f32 %v1535, %v1540
  %1542 = vset.pattern.permute.xlu0 2
  %1543 = vperm.xlu0 %1542, %v1521
  %v1544 = vpop.permute.xlu0 %1543
  %v1546 = vmul.f32 %v1544, %v961
  %v1547 = vadd.f32 %v1541, %v1546
  %1548 = vset.pattern.permute.xlu0 3
  %1549 = vperm.xlu0 %1548, %v1521
  %v1550 = vpop.permute.xlu0 %1549
  %v1552 = vmul.f32 %v1550, %v966
  %v1553 = vadd.f32 %v1547, %v1552
  %1554 = vset.pattern.permute.xlu0 4
  %1555 = vperm.xlu0 %1554, %v1521
  %v1556 = vpop.permute.xlu0 %1555
  %v1558 = vmul.f32 %v1556, %v971
  %v1559 = vadd.f32 %v1553, %v1558
  %1560 = vset.pattern.permute.xlu0 5
  %1561 = vperm.xlu0 %1560, %v1521
  %v1562 = vpop.permute.xlu0 %1561
  %v1564 = vmul.f32 %v1562, %v976
  %v1565 = vadd.f32 %v1559, %v1564
  %1566 = vset.pattern.permute.xlu0 6
  %1567 = vperm.xlu0 %1566, %v1521
  %v1568 = vpop.permute.xlu0 %1567
  %v1570 = vmul.f32 %v1568, %v981
  %v1571 = vadd.f32 %v1565, %v1570
  %1572 = vset.pattern.permute.xlu0 7
  %1573 = vperm.xlu0 %1572, %v1521
  %v1574 = vpop.permute.xlu0 %1573
  %v1576 = vmul.f32 %v1574, %v986
  %v1577 = vadd.f32 %v1571, %v1576
  %v1578 = vadd.f32 %v1577, %v1509
  %v1579 = vxor.u32 %v1578, 2147483648
  %v1580 = vmul.f32 %v1579, 1.442695
  %v1581 = vpow.pop %v1580
  %v1582 = vadd.f32 %v1581, 1.0
  %v1583 = vrcp.pop %v1582
  %v1584 = vmul.f32 1.0, %v1583
  %1586 = vrot.lane.b32.xlu0 %v1509, 64
  %v1587 = vpop.permute.xlu0 %1586
  %v1589 = vmul.f32 %v1584, %v1587
  %1591 = vrot.lane.b32.xlu0 %v1589, 64
  %v1592 = vpop.permute.xlu0 %1591
  %v1594 = vadd.f32 %v1577, %v1592
  %v1595 = vtanh.pop %v1594
  %v1596 = vsub.f32 1.0, %v1584
  %1598 = vrot.lane.b32.xlu0 %v1595, 96
  %v1599 = vpop.permute.xlu0 %1598
  %v1601 = vmul.f32 %v1596, %v1599
  %v1602 = vmul.f32 %v1584, %v1451
  %v1603 = vadd.f32 %v1601, %v1602
  %v1604 = vmul.f32 %v1603, %v1146
  %1606 = vrot.lane.b32.xlu0 %v1604, 96
  %v1607 = vpop.permute.xlu0 %1606
  %v1609 = vsel %vm222, %v1607, 0.0
  %1610 = vadd.xlane.f32.xlu0 %v1609
  %v1611 = vpop.xlane.xlu0 %1610
  %v1612 = vadd.f32 %v1611, %v59
  %1613 = vrot.lane.b32.xlu0 %v1308, 1
  %v1614 = vpop.permute.xlu0 %1613
  %1616 = vrot.lane.b32.xlu0 %v1460, 2
  %v1617 = vpop.permute.xlu0 %1616
  %1620 = vrot.lane.b32.xlu0 %v1612, 3
  %v1621 = vpop.permute.xlu0 %1620
  %vm1623 = vcmask 7168
  %v1624 = vsel %vm1623, %v1156, %v1614
  %vm1625 = vcmask 15360
  %v1626 = vsel %vm1625, %v1624, %v1617
  %vm1627 = vcmask 23552
  %v1628 = vsel %vm1627, %v1626, %v1621
  %vm1629 = vcmask 31744
  %1630 = vst.msk [vmem:[%s4] sm:$0xff] %vm1629, %v1628
  // Predicated region
  $region18: #{encoder_attention_decoder.1} parent=0 // pred_check
    _
  $region19: #{encoder_attention_decoder.1} parent=0 // pred_check_branch
    %1632 = sbr.rel (0) target = $region21
  $region20: #{encoder_attention_decoder.1} parent=0 // pred_region
    _
  $region21: #{encoder_attention_decoder.1} parent=0 // pred_fallthru
    _
  // Predicated region
  $region22: #{encoder_attention_decoder.1} parent=0 // pred_check
    _
  $region23: #{encoder_attention_decoder.1} parent=0 // pred_check_branch
    %1634 = sbr.rel (0) target = $region25
  $region24: #{encoder_attention_decoder.1} parent=0 // pred_region
    _
  $region25: #{encoder_attention_decoder.1} parent=0 // pred_fallthru
    _

</llo_original>
